<compile_context>
chip_gen: v6e
topology: v6e:2x2x1
jax: 0.10.0
libtpu: 0.0.40
codegen_flags: <defaults>
</compile_context>

<pallas_src>
import functools

import jax
import jax.numpy as jnp
from jax import lax
from jax.experimental import pallas as pl
from jax.experimental.pallas import tpu as pltpu


# ----------------------------------------------------------------------------
# Fused kernel: n_layers x LSTM + Linear + Sigmoid, everything VMEM-resident.
# ----------------------------------------------------------------------------
def _fused_lstm_kernel(n_layers, seq_len, batch, hidden, x_ref, *refs):
    """refs layout (after x_ref):
         [w_ih_t, w_hh_t, bias] * n_layers,          # per-layer weights
         w_lin_t, b_lin, h0, c0,                     # remaining inputs
         out_ref, hT_ref, cT_ref,                    # outputs
         gx_sc, seq_sc                               # VMEM scratch
    """
    T, B, H = seq_len, batch, hidden

    layer_refs = [tuple(refs[3 * l:3 * l + 3]) for l in range(n_layers)]
    base = 3 * n_layers
    w_lin_ref, b_lin_ref, h0_ref, c0_ref = refs[base:base + 4]
    out_ref, hT_ref, cT_ref = refs[base + 4:base + 7]
    gx_sc, seq_sc = refs[base + 7:base + 9]

    inp = x_ref[...]                                  # (T*B, in_dim)

    for l in range(n_layers):
        w_ih_ref, w_hh_ref, b_ref = layer_refs[l]

        # Hoisted (non-recurrent) input projection + bias for ALL time steps:
        # one MXU matmul with M = T*B rows instead of T matmuls with M = B.
        gx_sc[...] = (
            jnp.dot(inp, w_ih_ref[...], preferred_element_type=jnp.float32)
            + b_ref[...]
        )

        w_hh = w_hh_ref[...]                          # (H, 4H)

        def step(t, carry):
            h, c = carry
            g = gx_sc[pl.ds(t * B, B), :] + jnp.dot(
                h, w_hh, preferred_element_type=jnp.float32)     # (B, 4H)
            i_g = jax.nn.sigmoid(g[:, 0 * H:1 * H])
            f_g = jax.nn.sigmoid(g[:, 1 * H:2 * H])
            g_g = jnp.tanh(g[:, 2 * H:3 * H])
            o_g = jax.nn.sigmoid(g[:, 3 * H:4 * H])
            c_new = f_g * c + i_g * g_g
            h_new = o_g * jnp.tanh(c_new)
            seq_sc[pl.ds(t * B, B), :] = h_new        # VMEM only, no HBM traffic
            return h_new, c_new

        h_fin, c_fin = lax.fori_loop(
            0, T, step, (h0_ref[l], c0_ref[l]), unroll=True)

        hT_ref[l] = h_fin
        cT_ref[l] = c_fin

        # Next layer consumes this layer's hidden sequence straight from VMEM.
        inp = seq_sc[...]                             # (T*B, H)

    # Final Linear + Sigmoid on the full hidden sequence (one MXU matmul),
    # single lane-masked (V+1 = 17) store done exactly once.
    z = jnp.dot(inp, w_lin_ref[...],
                preferred_element_type=jnp.float32) + b_lin_ref[...]
    out_ref[...] = jax.nn.sigmoid(z).astype(out_ref.dtype)


# ----------------------------------------------------------------------------
# Parameter init: kernel-ready layout (pre-transposed weights, summed biases).
# ----------------------------------------------------------------------------
def init_params(key, hidden_dim, vocab_size, n_layers):
    params = {"lstm": [], "linear": {}}
    k = 1.0 / (hidden_dim ** 0.5)
    keys = jax.random.split(key, n_layers * 4 + 2)
    for layer in range(n_layers):
        in_dim = vocab_size if layer == 0 else hidden_dim
        k0, k1, k2, k3 = keys[layer * 4:(layer + 1) * 4]
        w_ih = jax.random.uniform(k0, (4 * hidden_dim, in_dim), jnp.float32, -k, k)
        w_hh = jax.random.uniform(k1, (4 * hidden_dim, hidden_dim), jnp.float32, -k, k)
        b_ih = jax.random.uniform(k2, (4 * hidden_dim,), jnp.float32, -k, k)
        b_hh = jax.random.uniform(k3, (4 * hidden_dim,), jnp.float32, -k, k)
        params["lstm"].append(dict(
            w_ih_t=w_ih.T,                           # (in_dim, 4H)
            w_hh_t=w_hh.T,                           # (H, 4H)
            bias=(b_ih + b_hh).reshape(1, -1),       # (1, 4H)
        ))
    w_lin = jax.random.uniform(keys[-2], (vocab_size + 1, hidden_dim),
                               jnp.float32, -k, k)
    b_lin = jax.random.uniform(keys[-1], (vocab_size + 1,), jnp.float32, -k, k)
    params["linear"]["w_t"] = w_lin.T                # (H, V+1)
    params["linear"]["b"] = b_lin.reshape(1, -1)     # (1, V+1)
    return params


# ----------------------------------------------------------------------------
# Forward: one fused pallas_call.
# ----------------------------------------------------------------------------
@jax.jit
def my_lstm_forward(params, x, h0, c0):
    """x: (T, B, V); h0, c0: (L, B, H).
    Returns (out (T*B, V+1), (hT (L,B,H), cT (L,B,H)))."""
    T, B, V = x.shape
    L, _, H = h0.shape
    V1 = params["linear"]["w_t"].shape[-1]

    x2d = x.reshape(T * B, V)

    inputs = [x2d]
    for p in params["lstm"]:
        inputs += [p["w_ih_t"], p["w_hh_t"], p["bias"]]
    inputs += [params["linear"]["w_t"], params["linear"]["b"], h0, c0]

    # Advisory cost so XLA schedules sensibly around the tiny custom call.
    flops = (2 * T * B * H * (V1 + 4 * H * L)
             + 2 * T * B * 4 * H * (V + (L - 1) * H))
    transcendentals = T * B * L * 5 * H + T * B * V1
    bytes_accessed = 4 * (sum(a.size for a in inputs)
                          + T * B * V1 + 2 * L * B * H)

    def vmem():
        return pl.BlockSpec(memory_space=pltpu.MemorySpace.VMEM)

    kernel = functools.partial(_fused_lstm_kernel, L, T, B, H)
    out, hT, cT = pl.pallas_call(
        kernel,
        out_shape=(
            jax.ShapeDtypeStruct((T * B, V1), jnp.float32),
            jax.ShapeDtypeStruct((L, B, H), jnp.float32),
            jax.ShapeDtypeStruct((L, B, H), jnp.float32),
        ),
        in_specs=[vmem() for _ in inputs],
        out_specs=(vmem(), vmem(), vmem()),
        scratch_shapes=[
            pltpu.VMEM((T * B, 4 * H), jnp.float32),   # hoisted gate pre-acts
            pltpu.VMEM((T * B, H), jnp.float32),       # per-layer hidden seq
        ],
        cost_estimate=pl.CostEstimate(
            flops=flops,
            transcendentals=transcendentals,
            bytes_accessed=bytes_accessed),
    )(*inputs)
    return out, (hT, cT)


# ----------------------------------------------------------------------------
# Pure-JAX reference (same math, same gate order) for a correctness check.
# ----------------------------------------------------------------------------
def _reference_forward(params, x, h0, c0):
    T, B, V = x.shape
    L, _, H = h0.shape
    hp = lax.Precision.HIGHEST
    inp = x
    hs, cs = [], []
    for l in range(L):
        p = params["lstm"][l]
        h, c = h0[l], c0[l]
        ys = []
        for t in range(T):
            g = (jnp.dot(inp[t], p["w_ih_t"], precision=hp)
                 + jnp.dot(h, p["w_hh_t"], precision=hp) + p["bias"])
            i_g = jax.nn.sigmoid(g[:, :H])
            f_g = jax.nn.sigmoid(g[:, H:2 * H])
            g_g = jnp.tanh(g[:, 2 * H:3 * H])
            o_g = jax.nn.sigmoid(g[:, 3 * H:])
            c = f_g * c + i_g * g_g
            h = o_g * jnp.tanh(c)
            ys.append(h)
        inp = jnp.stack(ys, 0)
        hs.append(h)
        cs.append(c)
    feats = inp.reshape(T * B, H)
    out = jax.nn.sigmoid(
        jnp.dot(feats, params["linear"]["w_t"], precision=hp)
        + params["linear"]["b"])
    return out, (jnp.stack(hs, 0), jnp.stack(cs, 0))


if __name__ == "__main__":
    hidden_dim = 32
    vocab_size = 16
    n_layers = 2
    seq_len = 8
    batch = 1   # init_hidden() / .view() in the PyTorch module imply batch=1

    key = jax.random.PRNGKey(0)
    k_params, k_x = jax.random.split(key)

    params = init_params(k_params, hidden_dim, vocab_size, n_layers)
    x = jax.random.normal(k_x, (seq_len, batch, vocab_size), jnp.float32)
    h0 = jnp.zeros((n_layers, batch, hidden_dim), jnp.float32)
    c0 = jnp.zeros((n_layers, batch, hidden_dim), jnp.float32)

    out, (hT, cT) = my_lstm_forward(params, x, h0, c0)
    jax.block_until_ready((out, hT, cT))

    assert out.shape == (seq_len, vocab_size + 1)
    assert hT.shape == (n_layers, batch, hidden_dim)
    assert cT.shape == (n_layers, batch, hidden_dim)

    ref_out, (ref_hT, ref_cT) = _reference_forward(params, x, h0, c0)
    assert bool(jnp.allclose(out, ref_out, atol=1e-2, rtol=1e-2))
    assert bool(jnp.allclose(hT, ref_hT, atol=1e-2, rtol=1e-2))
    assert bool(jnp.allclose(cT, ref_cT, atol=1e-2, rtol=1e-2))

    print("KERNEL_OK")
</pallas_src>

<mosaic_0001>
module attributes {stable_mosaic.version = 11 : i64} {
  func.func @_fused_lstm_kernel(%arg0: memref<8x16xf32, #tpu.memory_space<vmem>>, %arg1: memref<16x128xf32, #tpu.memory_space<vmem>>, %arg2: memref<32x128xf32, #tpu.memory_space<vmem>>, %arg3: memref<1x128xf32, #tpu.memory_space<vmem>>, %arg4: memref<32x128xf32, #tpu.memory_space<vmem>>, %arg5: memref<32x128xf32, #tpu.memory_space<vmem>>, %arg6: memref<1x128xf32, #tpu.memory_space<vmem>>, %arg7: memref<32x17xf32, #tpu.memory_space<vmem>>, %arg8: memref<1x17xf32, #tpu.memory_space<vmem>>, %arg9: memref<2x1x32xf32, #tpu.memory_space<vmem>>, %arg10: memref<2x1x32xf32, #tpu.memory_space<vmem>>, %arg11: memref<8x17xf32, #tpu.memory_space<vmem>>, %arg12: memref<2x1x32xf32, #tpu.memory_space<vmem>>, %arg13: memref<2x1x32xf32, #tpu.memory_space<vmem>>, %arg14: memref<8x128xf32, #tpu.memory_space<vmem>>, %arg15: memref<8x32xf32, #tpu.memory_space<vmem>>) attributes {dimension_semantics = [], scalar_prefetch = 0 : i64, scratch_operands = 2 : i64, tpu.core_type = #tpu.core_type<tc>} {
    %c0 = arith.constant 0 : index
    %c0_0 = arith.constant 0 : index
    %0 = vector.load %arg0[%c0, %c0_0] : memref<8x16xf32, #tpu.memory_space<vmem>>, vector<8x16xf32>
    %c0_1 = arith.constant 0 : index
    %c0_2 = arith.constant 0 : index
    %1 = vector.load %arg1[%c0_1, %c0_2] : memref<16x128xf32, #tpu.memory_space<vmem>>, vector<16x128xf32>
    %cst = arith.constant dense<0.000000e+00> : vector<8x128xf32>
    %2 = tpu.matmul %0, %1, %cst {dimension_numbers = #tpu.dot_dimension_numbers<[1], [0], [0], [1], [0, 0, 1, 1], [], []>} : vector<8x16xf32>, vector<16x128xf32>, vector<8x128xf32> -> vector<8x128xf32>
    %c0_3 = arith.constant 0 : index
    %c0_4 = arith.constant 0 : index
    %3 = vector.load %arg3[%c0_3, %c0_4] : memref<1x128xf32, #tpu.memory_space<vmem>>, vector<1x128xf32>
    %4 = vector.broadcast %3 : vector<1x128xf32> to vector<8x128xf32>
    %5 = arith.addf %2, %4 : vector<8x128xf32>
    %c0_5 = arith.constant 0 : index
    %c0_6 = arith.constant 0 : index
    %6 = vector.load %arg14[%c0_5, %c0_6] : memref<8x128xf32, #tpu.memory_space<vmem>>, vector<8x128xf32>
    tpu.vector_store %arg14[%c0_5, %c0_6], %5 {strides = array<i32>} : memref<8x128xf32, #tpu.memory_space<vmem>>, vector<8x128xf32>,
    %c0_7 = arith.constant 0 : index
    %c0_8 = arith.constant 0 : index
    %7 = vector.load %arg2[%c0_7, %c0_8] : memref<32x128xf32, #tpu.memory_space<vmem>>, vector<32x128xf32>
    %c0_9 = arith.constant 0 : index
    %c0_10 = arith.constant 0 : index
    %c0_11 = arith.constant 0 : index
    %8 = vector.load %arg9[%c0_9, %c0_10, %c0_11] : memref<2x1x32xf32, #tpu.memory_space<vmem>>, vector<1x1x32xf32>
    %9 = vector.shape_cast %8 : vector<1x1x32xf32> to vector<1x32xf32>
    %c0_12 = arith.constant 0 : index
    %c0_13 = arith.constant 0 : index
    %c0_14 = arith.constant 0 : index
    %10 = vector.load %arg10[%c0_12, %c0_13, %c0_14] : memref<2x1x32xf32, #tpu.memory_space<vmem>>, vector<1x1x32xf32>
    %11 = vector.shape_cast %10 : vector<1x1x32xf32> to vector<1x32xf32>
    %c0_i32 = arith.constant 0 : i32
    %c1_i32 = arith.constant 1 : i32
    %12 = arith.muli %c0_i32, %c1_i32 : i32
    %13 = arith.index_cast %12 : i32 to index
    %c0_15 = arith.constant 0 : index
    %14 = vector.load %arg14[%13, %c0_15] : memref<8x128xf32, #tpu.memory_space<vmem>>, vector<1x128xf32>
    %cst_16 = arith.constant dense<0.000000e+00> : vector<1x128xf32>
    %15 = tpu.matmul %9, %7, %cst_16 {dimension_numbers = #tpu.dot_dimension_numbers<[1], [0], [0], [1], [0, 0, 1, 1], [], []>} : vector<1x32xf32>, vector<32x128xf32>, vector<1x128xf32> -> vector<1x128xf32>
    %16 = arith.addf %14, %15 : vector<1x128xf32>
    %17 = vector.extract_strided_slice %16 {offsets = [0, 0], sizes = [1, 32], strides = [1, 1]} : vector<1x128xf32> to vector<1x32xf32>
    %18 = arith.negf %17 : vector<1x32xf32>
    %19 = math.exp %18 : vector<1x32xf32>
    %cst_17 = arith.constant 1.000000e+00 : f32
    %20 = vector.broadcast %cst_17 : f32 to vector<1x32xf32>
    %21 = arith.addf %20, %19 : vector<1x32xf32>
    %22 = arith.divf %20, %21 : vector<1x32xf32>
    %23 = vector.extract_strided_slice %16 {offsets = [0, 32], sizes = [1, 32], strides = [1, 1]} : vector<1x128xf32> to vector<1x32xf32>
    %24 = arith.negf %23 : vector<1x32xf32>
    %25 = math.exp %24 : vector<1x32xf32>
    %cst_18 = arith.constant 1.000000e+00 : f32
    %26 = vector.broadcast %cst_18 : f32 to vector<1x32xf32>
    %27 = arith.addf %26, %25 : vector<1x32xf32>
    %28 = arith.divf %26, %27 : vector<1x32xf32>
    %29 = vector.extract_strided_slice %16 {offsets = [0, 64], sizes = [1, 32], strides = [1, 1]} : vector<1x128xf32> to vector<1x32xf32>
    %30 = math.tanh %29 : vector<1x32xf32>
    %31 = vector.extract_strided_slice %16 {offsets = [0, 96], sizes = [1, 32], strides = [1, 1]} : vector<1x128xf32> to vector<1x32xf32>
    %32 = arith.negf %31 : vector<1x32xf32>
    %33 = math.exp %32 : vector<1x32xf32>
    %cst_19 = arith.constant 1.000000e+00 : f32
    %34 = vector.broadcast %cst_19 : f32 to vector<1x32xf32>
    %35 = arith.addf %34, %33 : vector<1x32xf32>
    %36 = arith.divf %34, %35 : vector<1x32xf32>
    %37 = arith.mulf %28, %11 : vector<1x32xf32>
    %38 = arith.mulf %22, %30 : vector<1x32xf32>
    %39 = arith.addf %37, %38 : vector<1x32xf32>
    %40 = math.tanh %39 : vector<1x32xf32>
    %41 = arith.mulf %36, %40 : vector<1x32xf32>
    %c1_i32_20 = arith.constant 1 : i32
    %42 = arith.muli %c0_i32, %c1_i32_20 : i32
    %43 = arith.index_cast %42 : i32 to index
    %c0_21 = arith.constant 0 : index
    %44 = vector.load %arg15[%43, %c0_21] : memref<8x32xf32, #tpu.memory_space<vmem>>, vector<1x32xf32>
    tpu.vector_store %arg15[%43, %c0_21], %41 {strides = array<i32>} : memref<8x32xf32, #tpu.memory_space<vmem>>, vector<1x32xf32>,
    %c1_i32_22 = arith.constant 1 : i32
    %c1_i32_23 = arith.constant 1 : i32
    %45 = arith.muli %c1_i32_22, %c1_i32_23 : i32
    %46 = arith.index_cast %45 : i32 to index
    %c0_24 = arith.constant 0 : index
    %47 = vector.load %arg14[%46, %c0_24] : memref<8x128xf32, #tpu.memory_space<vmem>>, vector<1x128xf32>
    %cst_25 = arith.constant dense<0.000000e+00> : vector<1x128xf32>
    %48 = tpu.matmul %41, %7, %cst_25 {dimension_numbers = #tpu.dot_dimension_numbers<[1], [0], [0], [1], [0, 0, 1, 1], [], []>} : vector<1x32xf32>, vector<32x128xf32>, vector<1x128xf32> -> vector<1x128xf32>
    %49 = arith.addf %47, %48 : vector<1x128xf32>
    %50 = vector.extract_strided_slice %49 {offsets = [0, 0], sizes = [1, 32], strides = [1, 1]} : vector<1x128xf32> to vector<1x32xf32>
    %51 = arith.negf %50 : vector<1x32xf32>
    %52 = math.exp %51 : vector<1x32xf32>
    %cst_26 = arith.constant 1.000000e+00 : f32
    %53 = vector.broadcast %cst_26 : f32 to vector<1x32xf32>
    %54 = arith.addf %53, %52 : vector<1x32xf32>
    %55 = arith.divf %53, %54 : vector<1x32xf32>
    %56 = vector.extract_strided_slice %49 {offsets = [0, 32], sizes = [1, 32], strides = [1, 1]} : vector<1x128xf32> to vector<1x32xf32>
    %57 = arith.negf %56 : vector<1x32xf32>
    %58 = math.exp %57 : vector<1x32xf32>
    %cst_27 = arith.constant 1.000000e+00 : f32
    %59 = vector.broadcast %cst_27 : f32 to vector<1x32xf32>
    %60 = arith.addf %59, %58 : vector<1x32xf32>
    %61 = arith.divf %59, %60 : vector<1x32xf32>
    %62 = vector.extract_strided_slice %49 {offsets = [0, 64], sizes = [1, 32], strides = [1, 1]} : vector<1x128xf32> to vector<1x32xf32>
    %63 = math.tanh %62 : vector<1x32xf32>
    %64 = vector.extract_strided_slice %49 {offsets = [0, 96], sizes = [1, 32], strides = [1, 1]} : vector<1x128xf32> to vector<1x32xf32>
    %65 = arith.negf %64 : vector<1x32xf32>
    %66 = math.exp %65 : vector<1x32xf32>
    %cst_28 = arith.constant 1.000000e+00 : f32
    %67 = vector.broadcast %cst_28 : f32 to vector<1x32xf32>
    %68 = arith.addf %67, %66 : vector<1x32xf32>
    %69 = arith.divf %67, %68 : vector<1x32xf32>
    %70 = arith.mulf %61, %39 : vector<1x32xf32>
    %71 = arith.mulf %55, %63 : vector<1x32xf32>
    %72 = arith.addf %70, %71 : vector<1x32xf32>
    %73 = math.tanh %72 : vector<1x32xf32>
    %74 = arith.mulf %69, %73 : vector<1x32xf32>
    %c1_i32_29 = arith.constant 1 : i32
    %75 = arith.muli %c1_i32_22, %c1_i32_29 : i32
    %76 = arith.index_cast %75 : i32 to index
    %c0_30 = arith.constant 0 : index
    %77 = vector.load %arg15[%76, %c0_30] : memref<8x32xf32, #tpu.memory_space<vmem>>, vector<1x32xf32>
    tpu.vector_store %arg15[%76, %c0_30], %74 {strides = array<i32>} : memref<8x32xf32, #tpu.memory_space<vmem>>, vector<1x32xf32>,
    %c2_i32 = arith.constant 2 : i32
    %c1_i32_31 = arith.constant 1 : i32
    %78 = arith.muli %c2_i32, %c1_i32_31 : i32
    %79 = arith.index_cast %78 : i32 to index
    %c0_32 = arith.constant 0 : index
    %80 = vector.load %arg14[%79, %c0_32] : memref<8x128xf32, #tpu.memory_space<vmem>>, vector<1x128xf32>
    %cst_33 = arith.constant dense<0.000000e+00> : vector<1x128xf32>
    %81 = tpu.matmul %74, %7, %cst_33 {dimension_numbers = #tpu.dot_dimension_numbers<[1], [0], [0], [1], [0, 0, 1, 1], [], []>} : vector<1x32xf32>, vector<32x128xf32>, vector<1x128xf32> -> vector<1x128xf32>
    %82 = arith.addf %80, %81 : vector<1x128xf32>
    %83 = vector.extract_strided_slice %82 {offsets = [0, 0], sizes = [1, 32], strides = [1, 1]} : vector<1x128xf32> to vector<1x32xf32>
    %84 = arith.negf %83 : vector<1x32xf32>
    %85 = math.exp %84 : vector<1x32xf32>
    %cst_34 = arith.constant 1.000000e+00 : f32
    %86 = vector.broadcast %cst_34 : f32 to vector<1x32xf32>
    %87 = arith.addf %86, %85 : vector<1x32xf32>
    %88 = arith.divf %86, %87 : vector<1x32xf32>
    %89 = vector.extract_strided_slice %82 {offsets = [0, 32], sizes = [1, 32], strides = [1, 1]} : vector<1x128xf32> to vector<1x32xf32>
    %90 = arith.negf %89 : vector<1x32xf32>
    %91 = math.exp %90 : vector<1x32xf32>
    %cst_35 = arith.constant 1.000000e+00 : f32
    %92 = vector.broadcast %cst_35 : f32 to vector<1x32xf32>
    %93 = arith.addf %92, %91 : vector<1x32xf32>
    %94 = arith.divf %92, %93 : vector<1x32xf32>
    %95 = vector.extract_strided_slice %82 {offsets = [0, 64], sizes = [1, 32], strides = [1, 1]} : vector<1x128xf32> to vector<1x32xf32>
    %96 = math.tanh %95 : vector<1x32xf32>
    %97 = vector.extract_strided_slice %82 {offsets = [0, 96], sizes = [1, 32], strides = [1, 1]} : vector<1x128xf32> to vector<1x32xf32>
    %98 = arith.negf %97 : vector<1x32xf32>
    %99 = math.exp %98 : vector<1x32xf32>
    %cst_36 = arith.constant 1.000000e+00 : f32
    %100 = vector.broadcast %cst_36 : f32 to vector<1x32xf32>
    %101 = arith.addf %100, %99 : vector<1x32xf32>
    %102 = arith.divf %100, %101 : vector<1x32xf32>
    %103 = arith.mulf %94, %72 : vector<1x32xf32>
    %104 = arith.mulf %88, %96 : vector<1x32xf32>
    %105 = arith.addf %103, %104 : vector<1x32xf32>
    %106 = math.tanh %105 : vector<1x32xf32>
    %107 = arith.mulf %102, %106 : vector<1x32xf32>
    %c1_i32_37 = arith.constant 1 : i32
    %108 = arith.muli %c2_i32, %c1_i32_37 : i32
    %109 = arith.index_cast %108 : i32 to index
    %c0_38 = arith.constant 0 : index
    %110 = vector.load %arg15[%109, %c0_38] : memref<8x32xf32, #tpu.memory_space<vmem>>, vector<1x32xf32>
    tpu.vector_store %arg15[%109, %c0_38], %107 {strides = array<i32>} : memref<8x32xf32, #tpu.memory_space<vmem>>, vector<1x32xf32>,
    %c3_i32 = arith.constant 3 : i32
    %c1_i32_39 = arith.constant 1 : i32
    %111 = arith.muli %c3_i32, %c1_i32_39 : i32
    %112 = arith.index_cast %111 : i32 to index
    %c0_40 = arith.constant 0 : index
    %113 = vector.load %arg14[%112, %c0_40] : memref<8x128xf32, #tpu.memory_space<vmem>>, vector<1x128xf32>
    %cst_41 = arith.constant dense<0.000000e+00> : vector<1x128xf32>
    %114 = tpu.matmul %107, %7, %cst_41 {dimension_numbers = #tpu.dot_dimension_numbers<[1], [0], [0], [1], [0, 0, 1, 1], [], []>} : vector<1x32xf32>, vector<32x128xf32>, vector<1x128xf32> -> vector<1x128xf32>
    %115 = arith.addf %113, %114 : vector<1x128xf32>
    %116 = vector.extract_strided_slice %115 {offsets = [0, 0], sizes = [1, 32], strides = [1, 1]} : vector<1x128xf32> to vector<1x32xf32>
    %117 = arith.negf %116 : vector<1x32xf32>
    %118 = math.exp %117 : vector<1x32xf32>
    %cst_42 = arith.constant 1.000000e+00 : f32
    %119 = vector.broadcast %cst_42 : f32 to vector<1x32xf32>
    %120 = arith.addf %119, %118 : vector<1x32xf32>
    %121 = arith.divf %119, %120 : vector<1x32xf32>
    %122 = vector.extract_strided_slice %115 {offsets = [0, 32], sizes = [1, 32], strides = [1, 1]} : vector<1x128xf32> to vector<1x32xf32>
    %123 = arith.negf %122 : vector<1x32xf32>
    %124 = math.exp %123 : vector<1x32xf32>
    %cst_43 = arith.constant 1.000000e+00 : f32
    %125 = vector.broadcast %cst_43 : f32 to vector<1x32xf32>
    %126 = arith.addf %125, %124 : vector<1x32xf32>
    %127 = arith.divf %125, %126 : vector<1x32xf32>
    %128 = vector.extract_strided_slice %115 {offsets = [0, 64], sizes = [1, 32], strides = [1, 1]} : vector<1x128xf32> to vector<1x32xf32>
    %129 = math.tanh %128 : vector<1x32xf32>
    %130 = vector.extract_strided_slice %115 {offsets = [0, 96], sizes = [1, 32], strides = [1, 1]} : vector<1x128xf32> to vector<1x32xf32>
    %131 = arith.negf %130 : vector<1x32xf32>
    %132 = math.exp %131 : vector<1x32xf32>
    %cst_44 = arith.constant 1.000000e+00 : f32
    %133 = vector.broadcast %cst_44 : f32 to vector<1x32xf32>
    %134 = arith.addf %133, %132 : vector<1x32xf32>
    %135 = arith.divf %133, %134 : vector<1x32xf32>
    %136 = arith.mulf %127, %105 : vector<1x32xf32>
    %137 = arith.mulf %121, %129 : vector<1x32xf32>
    %138 = arith.addf %136, %137 : vector<1x32xf32>
    %139 = math.tanh %138 : vector<1x32xf32>
    %140 = arith.mulf %135, %139 : vector<1x32xf32>
    %c1_i32_45 = arith.constant 1 : i32
    %141 = arith.muli %c3_i32, %c1_i32_45 : i32
    %142 = arith.index_cast %141 : i32 to index
    %c0_46 = arith.constant 0 : index
    %143 = vector.load %arg15[%142, %c0_46] : memref<8x32xf32, #tpu.memory_space<vmem>>, vector<1x32xf32>
    tpu.vector_store %arg15[%142, %c0_46], %140 {strides = array<i32>} : memref<8x32xf32, #tpu.memory_space<vmem>>, vector<1x32xf32>,
    %c4_i32 = arith.constant 4 : i32
    %c1_i32_47 = arith.constant 1 : i32
    %144 = arith.muli %c4_i32, %c1_i32_47 : i32
    %145 = arith.index_cast %144 : i32 to index
    %c0_48 = arith.constant 0 : index
    %146 = vector.load %arg14[%145, %c0_48] : memref<8x128xf32, #tpu.memory_space<vmem>>, vector<1x128xf32>
    %cst_49 = arith.constant dense<0.000000e+00> : vector<1x128xf32>
    %147 = tpu.matmul %140, %7, %cst_49 {dimension_numbers = #tpu.dot_dimension_numbers<[1], [0], [0], [1], [0, 0, 1, 1], [], []>} : vector<1x32xf32>, vector<32x128xf32>, vector<1x128xf32> -> vector<1x128xf32>
    %148 = arith.addf %146, %147 : vector<1x128xf32>
    %149 = vector.extract_strided_slice %148 {offsets = [0, 0], sizes = [1, 32], strides = [1, 1]} : vector<1x128xf32> to vector<1x32xf32>
    %150 = arith.negf %149 : vector<1x32xf32>
    %151 = math.exp %150 : vector<1x32xf32>
    %cst_50 = arith.constant 1.000000e+00 : f32
    %152 = vector.broadcast %cst_50 : f32 to vector<1x32xf32>
    %153 = arith.addf %152, %151 : vector<1x32xf32>
    %154 = arith.divf %152, %153 : vector<1x32xf32>
    %155 = vector.extract_strided_slice %148 {offsets = [0, 32], sizes = [1, 32], strides = [1, 1]} : vector<1x128xf32> to vector<1x32xf32>
    %156 = arith.negf %155 : vector<1x32xf32>
    %157 = math.exp %156 : vector<1x32xf32>
    %cst_51 = arith.constant 1.000000e+00 : f32
    %158 = vector.broadcast %cst_51 : f32 to vector<1x32xf32>
    %159 = arith.addf %158, %157 : vector<1x32xf32>
    %160 = arith.divf %158, %159 : vector<1x32xf32>
    %161 = vector.extract_strided_slice %148 {offsets = [0, 64], sizes = [1, 32], strides = [1, 1]} : vector<1x128xf32> to vector<1x32xf32>
    %162 = math.tanh %161 : vector<1x32xf32>
    %163 = vector.extract_strided_slice %148 {offsets = [0, 96], sizes = [1, 32], strides = [1, 1]} : vector<1x128xf32> to vector<1x32xf32>
    %164 = arith.negf %163 : vector<1x32xf32>
    %165 = math.exp %164 : vector<1x32xf32>
    %cst_52 = arith.constant 1.000000e+00 : f32
    %166 = vector.broadcast %cst_52 : f32 to vector<1x32xf32>
    %167 = arith.addf %166, %165 : vector<1x32xf32>
    %168 = arith.divf %166, %167 : vector<1x32xf32>
    %169 = arith.mulf %160, %138 : vector<1x32xf32>
    %170 = arith.mulf %154, %162 : vector<1x32xf32>
    %171 = arith.addf %169, %170 : vector<1x32xf32>
    %172 = math.tanh %171 : vector<1x32xf32>
    %173 = arith.mulf %168, %172 : vector<1x32xf32>
    %c1_i32_53 = arith.constant 1 : i32
    %174 = arith.muli %c4_i32, %c1_i32_53 : i32
    %175 = arith.index_cast %174 : i32 to index
    %c0_54 = arith.constant 0 : index
    %176 = vector.load %arg15[%175, %c0_54] : memref<8x32xf32, #tpu.memory_space<vmem>>, vector<1x32xf32>
    tpu.vector_store %arg15[%175, %c0_54], %173 {strides = array<i32>} : memref<8x32xf32, #tpu.memory_space<vmem>>, vector<1x32xf32>,
    %c5_i32 = arith.constant 5 : i32
    %c1_i32_55 = arith.constant 1 : i32
    %177 = arith.muli %c5_i32, %c1_i32_55 : i32
    %178 = arith.index_cast %177 : i32 to index
    %c0_56 = arith.constant 0 : index
    %179 = vector.load %arg14[%178, %c0_56] : memref<8x128xf32, #tpu.memory_space<vmem>>, vector<1x128xf32>
    %cst_57 = arith.constant dense<0.000000e+00> : vector<1x128xf32>
    %180 = tpu.matmul %173, %7, %cst_57 {dimension_numbers = #tpu.dot_dimension_numbers<[1], [0], [0], [1], [0, 0, 1, 1], [], []>} : vector<1x32xf32>, vector<32x128xf32>, vector<1x128xf32> -> vector<1x128xf32>
    %181 = arith.addf %179, %180 : vector<1x128xf32>
    %182 = vector.extract_strided_slice %181 {offsets = [0, 0], sizes = [1, 32], strides = [1, 1]} : vector<1x128xf32> to vector<1x32xf32>
    %183 = arith.negf %182 : vector<1x32xf32>
    %184 = math.exp %183 : vector<1x32xf32>
    %cst_58 = arith.constant 1.000000e+00 : f32
    %185 = vector.broadcast %cst_58 : f32 to vector<1x32xf32>
    %186 = arith.addf %185, %184 : vector<1x32xf32>
    %187 = arith.divf %185, %186 : vector<1x32xf32>
    %188 = vector.extract_strided_slice %181 {offsets = [0, 32], sizes = [1, 32], strides = [1, 1]} : vector<1x128xf32> to vector<1x32xf32>
    %189 = arith.negf %188 : vector<1x32xf32>
    %190 = math.exp %189 : vector<1x32xf32>
    %cst_59 = arith.constant 1.000000e+00 : f32
    %191 = vector.broadcast %cst_59 : f32 to vector<1x32xf32>
    %192 = arith.addf %191, %190 : vector<1x32xf32>
    %193 = arith.divf %191, %192 : vector<1x32xf32>
    %194 = vector.extract_strided_slice %181 {offsets = [0, 64], sizes = [1, 32], strides = [1, 1]} : vector<1x128xf32> to vector<1x32xf32>
    %195 = math.tanh %194 : vector<1x32xf32>
    %196 = vector.extract_strided_slice %181 {offsets = [0, 96], sizes = [1, 32], strides = [1, 1]} : vector<1x128xf32> to vector<1x32xf32>
    %197 = arith.negf %196 : vector<1x32xf32>
    %198 = math.exp %197 : vector<1x32xf32>
    %cst_60 = arith.constant 1.000000e+00 : f32
    %199 = vector.broadcast %cst_60 : f32 to vector<1x32xf32>
    %200 = arith.addf %199, %198 : vector<1x32xf32>
    %201 = arith.divf %199, %200 : vector<1x32xf32>
    %202 = arith.mulf %193, %171 : vector<1x32xf32>
    %203 = arith.mulf %187, %195 : vector<1x32xf32>
    %204 = arith.addf %202, %203 : vector<1x32xf32>
    %205 = math.tanh %204 : vector<1x32xf32>
    %206 = arith.mulf %201, %205 : vector<1x32xf32>
    %c1_i32_61 = arith.constant 1 : i32
    %207 = arith.muli %c5_i32, %c1_i32_61 : i32
    %208 = arith.index_cast %207 : i32 to index
    %c0_62 = arith.constant 0 : index
    %209 = vector.load %arg15[%208, %c0_62] : memref<8x32xf32, #tpu.memory_space<vmem>>, vector<1x32xf32>
    tpu.vector_store %arg15[%208, %c0_62], %206 {strides = array<i32>} : memref<8x32xf32, #tpu.memory_space<vmem>>, vector<1x32xf32>,
    %c6_i32 = arith.constant 6 : i32
    %c1_i32_63 = arith.constant 1 : i32
    %210 = arith.muli %c6_i32, %c1_i32_63 : i32
    %211 = arith.index_cast %210 : i32 to index
    %c0_64 = arith.constant 0 : index
    %212 = vector.load %arg14[%211, %c0_64] : memref<8x128xf32, #tpu.memory_space<vmem>>, vector<1x128xf32>
    %cst_65 = arith.constant dense<0.000000e+00> : vector<1x128xf32>
    %213 = tpu.matmul %206, %7, %cst_65 {dimension_numbers = #tpu.dot_dimension_numbers<[1], [0], [0], [1], [0, 0, 1, 1], [], []>} : vector<1x32xf32>, vector<32x128xf32>, vector<1x128xf32> -> vector<1x128xf32>
    %214 = arith.addf %212, %213 : vector<1x128xf32>
    %215 = vector.extract_strided_slice %214 {offsets = [0, 0], sizes = [1, 32], strides = [1, 1]} : vector<1x128xf32> to vector<1x32xf32>
    %216 = arith.negf %215 : vector<1x32xf32>
    %217 = math.exp %216 : vector<1x32xf32>
    %cst_66 = arith.constant 1.000000e+00 : f32
    %218 = vector.broadcast %cst_66 : f32 to vector<1x32xf32>
    %219 = arith.addf %218, %217 : vector<1x32xf32>
    %220 = arith.divf %218, %219 : vector<1x32xf32>
    %221 = vector.extract_strided_slice %214 {offsets = [0, 32], sizes = [1, 32], strides = [1, 1]} : vector<1x128xf32> to vector<1x32xf32>
    %222 = arith.negf %221 : vector<1x32xf32>
    %223 = math.exp %222 : vector<1x32xf32>
    %cst_67 = arith.constant 1.000000e+00 : f32
    %224 = vector.broadcast %cst_67 : f32 to vector<1x32xf32>
    %225 = arith.addf %224, %223 : vector<1x32xf32>
    %226 = arith.divf %224, %225 : vector<1x32xf32>
    %227 = vector.extract_strided_slice %214 {offsets = [0, 64], sizes = [1, 32], strides = [1, 1]} : vector<1x128xf32> to vector<1x32xf32>
    %228 = math.tanh %227 : vector<1x32xf32>
    %229 = vector.extract_strided_slice %214 {offsets = [0, 96], sizes = [1, 32], strides = [1, 1]} : vector<1x128xf32> to vector<1x32xf32>
    %230 = arith.negf %229 : vector<1x32xf32>
    %231 = math.exp %230 : vector<1x32xf32>
    %cst_68 = arith.constant 1.000000e+00 : f32
    %232 = vector.broadcast %cst_68 : f32 to vector<1x32xf32>
    %233 = arith.addf %232, %231 : vector<1x32xf32>
    %234 = arith.divf %232, %233 : vector<1x32xf32>
    %235 = arith.mulf %226, %204 : vector<1x32xf32>
    %236 = arith.mulf %220, %228 : vector<1x32xf32>
    %237 = arith.addf %235, %236 : vector<1x32xf32>
    %238 = math.tanh %237 : vector<1x32xf32>
    %239 = arith.mulf %234, %238 : vector<1x32xf32>
    %c1_i32_69 = arith.constant 1 : i32
    %240 = arith.muli %c6_i32, %c1_i32_69 : i32
    %241 = arith.index_cast %240 : i32 to index
    %c0_70 = arith.constant 0 : index
    %242 = vector.load %arg15[%241, %c0_70] : memref<8x32xf32, #tpu.memory_space<vmem>>, vector<1x32xf32>
    tpu.vector_store %arg15[%241, %c0_70], %239 {strides = array<i32>} : memref<8x32xf32, #tpu.memory_space<vmem>>, vector<1x32xf32>,
    %c7_i32 = arith.constant 7 : i32
    %c1_i32_71 = arith.constant 1 : i32
    %243 = arith.muli %c7_i32, %c1_i32_71 : i32
    %244 = arith.index_cast %243 : i32 to index
    %c0_72 = arith.constant 0 : index
    %245 = vector.load %arg14[%244, %c0_72] : memref<8x128xf32, #tpu.memory_space<vmem>>, vector<1x128xf32>
    %cst_73 = arith.constant dense<0.000000e+00> : vector<1x128xf32>
    %246 = tpu.matmul %239, %7, %cst_73 {dimension_numbers = #tpu.dot_dimension_numbers<[1], [0], [0], [1], [0, 0, 1, 1], [], []>} : vector<1x32xf32>, vector<32x128xf32>, vector<1x128xf32> -> vector<1x128xf32>
    %247 = arith.addf %245, %246 : vector<1x128xf32>
    %248 = vector.extract_strided_slice %247 {offsets = [0, 0], sizes = [1, 32], strides = [1, 1]} : vector<1x128xf32> to vector<1x32xf32>
    %249 = arith.negf %248 : vector<1x32xf32>
    %250 = math.exp %249 : vector<1x32xf32>
    %cst_74 = arith.constant 1.000000e+00 : f32
    %251 = vector.broadcast %cst_74 : f32 to vector<1x32xf32>
    %252 = arith.addf %251, %250 : vector<1x32xf32>
    %253 = arith.divf %251, %252 : vector<1x32xf32>
    %254 = vector.extract_strided_slice %247 {offsets = [0, 32], sizes = [1, 32], strides = [1, 1]} : vector<1x128xf32> to vector<1x32xf32>
    %255 = arith.negf %254 : vector<1x32xf32>
    %256 = math.exp %255 : vector<1x32xf32>
    %cst_75 = arith.constant 1.000000e+00 : f32
    %257 = vector.broadcast %cst_75 : f32 to vector<1x32xf32>
    %258 = arith.addf %257, %256 : vector<1x32xf32>
    %259 = arith.divf %257, %258 : vector<1x32xf32>
    %260 = vector.extract_strided_slice %247 {offsets = [0, 64], sizes = [1, 32], strides = [1, 1]} : vector<1x128xf32> to vector<1x32xf32>
    %261 = math.tanh %260 : vector<1x32xf32>
    %262 = vector.extract_strided_slice %247 {offsets = [0, 96], sizes = [1, 32], strides = [1, 1]} : vector<1x128xf32> to vector<1x32xf32>
    %263 = arith.negf %262 : vector<1x32xf32>
    %264 = math.exp %263 : vector<1x32xf32>
    %cst_76 = arith.constant 1.000000e+00 : f32
    %265 = vector.broadcast %cst_76 : f32 to vector<1x32xf32>
    %266 = arith.addf %265, %264 : vector<1x32xf32>
    %267 = arith.divf %265, %266 : vector<1x32xf32>
    %268 = arith.mulf %259, %237 : vector<1x32xf32>
    %269 = arith.mulf %253, %261 : vector<1x32xf32>
    %270 = arith.addf %268, %269 : vector<1x32xf32>
    %271 = math.tanh %270 : vector<1x32xf32>
    %272 = arith.mulf %267, %271 : vector<1x32xf32>
    %c1_i32_77 = arith.constant 1 : i32
    %273 = arith.muli %c7_i32, %c1_i32_77 : i32
    %274 = arith.index_cast %273 : i32 to index
    %c0_78 = arith.constant 0 : index
    %275 = vector.load %arg15[%274, %c0_78] : memref<8x32xf32, #tpu.memory_space<vmem>>, vector<1x32xf32>
    tpu.vector_store %arg15[%274, %c0_78], %272 {strides = array<i32>} : memref<8x32xf32, #tpu.memory_space<vmem>>, vector<1x32xf32>,
    %c8_i32 = arith.constant 8 : i32
    %c0_79 = arith.constant 0 : index
    %c0_80 = arith.constant 0 : index
    %c0_81 = arith.constant 0 : index
    %276 = vector.load %arg12[%c0_79, %c0_80, %c0_81] : memref<2x1x32xf32, #tpu.memory_space<vmem>>, vector<1x1x32xf32>
    %277 = vector.shape_cast %276 : vector<1x1x32xf32> to vector<1x32xf32>
    %278 = vector.shape_cast %272 : vector<1x32xf32> to vector<1x1x32xf32>
    tpu.vector_store %arg12[%c0_79, %c0_80, %c0_81], %278 {strides = array<i32>} : memref<2x1x32xf32, #tpu.memory_space<vmem>>, vector<1x1x32xf32>,
    %c0_82 = arith.constant 0 : index
    %c0_83 = arith.constant 0 : index
    %c0_84 = arith.constant 0 : index
    %279 = vector.load %arg13[%c0_82, %c0_83, %c0_84] : memref<2x1x32xf32, #tpu.memory_space<vmem>>, vector<1x1x32xf32>
    %280 = vector.shape_cast %279 : vector<1x1x32xf32> to vector<1x32xf32>
    %281 = vector.shape_cast %270 : vector<1x32xf32> to vector<1x1x32xf32>
    tpu.vector_store %arg13[%c0_82, %c0_83, %c0_84], %281 {strides = array<i32>} : memref<2x1x32xf32, #tpu.memory_space<vmem>>, vector<1x1x32xf32>,
    %c0_85 = arith.constant 0 : index
    %c0_86 = arith.constant 0 : index
    %282 = vector.load %arg15[%c0_85, %c0_86] : memref<8x32xf32, #tpu.memory_space<vmem>>, vector<8x32xf32>
    %c0_87 = arith.constant 0 : index
    %c0_88 = arith.constant 0 : index
    %283 = vector.load %arg4[%c0_87, %c0_88] : memref<32x128xf32, #tpu.memory_space<vmem>>, vector<32x128xf32>
    %cst_89 = arith.constant dense<0.000000e+00> : vector<8x128xf32>
    %284 = tpu.matmul %282, %283, %cst_89 {dimension_numbers = #tpu.dot_dimension_numbers<[1], [0], [0], [1], [0, 0, 1, 1], [], []>} : vector<8x32xf32>, vector<32x128xf32>, vector<8x128xf32> -> vector<8x128xf32>
    %c0_90 = arith.constant 0 : index
    %c0_91 = arith.constant 0 : index
    %285 = vector.load %arg6[%c0_90, %c0_91] : memref<1x128xf32, #tpu.memory_space<vmem>>, vector<1x128xf32>
    %286 = vector.broadcast %285 : vector<1x128xf32> to vector<8x128xf32>
    %287 = arith.addf %284, %286 : vector<8x128xf32>
    %c0_92 = arith.constant 0 : index
    %c0_93 = arith.constant 0 : index
    %288 = vector.load %arg14[%c0_92, %c0_93] : memref<8x128xf32, #tpu.memory_space<vmem>>, vector<8x128xf32>
    tpu.vector_store %arg14[%c0_92, %c0_93], %287 {strides = array<i32>} : memref<8x128xf32, #tpu.memory_space<vmem>>, vector<8x128xf32>,
    %c0_94 = arith.constant 0 : index
    %c0_95 = arith.constant 0 : index
    %289 = vector.load %arg5[%c0_94, %c0_95] : memref<32x128xf32, #tpu.memory_space<vmem>>, vector<32x128xf32>
    %c1 = arith.constant 1 : index
    %c0_96 = arith.constant 0 : index
    %c0_97 = arith.constant 0 : index
    %290 = vector.load %arg9[%c1, %c0_96, %c0_97] : memref<2x1x32xf32, #tpu.memory_space<vmem>>, vector<1x1x32xf32>
    %291 = vector.shape_cast %290 : vector<1x1x32xf32> to vector<1x32xf32>
    %c1_98 = arith.constant 1 : index
    %c0_99 = arith.constant 0 : index
    %c0_100 = arith.constant 0 : index
    %292 = vector.load %arg10[%c1_98, %c0_99, %c0_100] : memref<2x1x32xf32, #tpu.memory_space<vmem>>, vector<1x1x32xf32>
    %293 = vector.shape_cast %292 : vector<1x1x32xf32> to vector<1x32xf32>
    %c0_i32_101 = arith.constant 0 : i32
    %c1_i32_102 = arith.constant 1 : i32
    %294 = arith.muli %c0_i32_101, %c1_i32_102 : i32
    %295 = arith.index_cast %294 : i32 to index
    %c0_103 = arith.constant 0 : index
    %296 = vector.load %arg14[%295, %c0_103] : memref<8x128xf32, #tpu.memory_space<vmem>>, vector<1x128xf32>
    %cst_104 = arith.constant dense<0.000000e+00> : vector<1x128xf32>
    %297 = tpu.matmul %291, %289, %cst_104 {dimension_numbers = #tpu.dot_dimension_numbers<[1], [0], [0], [1], [0, 0, 1, 1], [], []>} : vector<1x32xf32>, vector<32x128xf32>, vector<1x128xf32> -> vector<1x128xf32>
    %298 = arith.addf %296, %297 : vector<1x128xf32>
    %299 = vector.extract_strided_slice %298 {offsets = [0, 0], sizes = [1, 32], strides = [1, 1]} : vector<1x128xf32> to vector<1x32xf32>
    %300 = arith.negf %299 : vector<1x32xf32>
    %301 = math.exp %300 : vector<1x32xf32>
    %cst_105 = arith.constant 1.000000e+00 : f32
    %302 = vector.broadcast %cst_105 : f32 to vector<1x32xf32>
    %303 = arith.addf %302, %301 : vector<1x32xf32>
    %304 = arith.divf %302, %303 : vector<1x32xf32>
    %305 = vector.extract_strided_slice %298 {offsets = [0, 32], sizes = [1, 32], strides = [1, 1]} : vector<1x128xf32> to vector<1x32xf32>
    %306 = arith.negf %305 : vector<1x32xf32>
    %307 = math.exp %306 : vector<1x32xf32>
    %cst_106 = arith.constant 1.000000e+00 : f32
    %308 = vector.broadcast %cst_106 : f32 to vector<1x32xf32>
    %309 = arith.addf %308, %307 : vector<1x32xf32>
    %310 = arith.divf %308, %309 : vector<1x32xf32>
    %311 = vector.extract_strided_slice %298 {offsets = [0, 64], sizes = [1, 32], strides = [1, 1]} : vector<1x128xf32> to vector<1x32xf32>
    %312 = math.tanh %311 : vector<1x32xf32>
    %313 = vector.extract_strided_slice %298 {offsets = [0, 96], sizes = [1, 32], strides = [1, 1]} : vector<1x128xf32> to vector<1x32xf32>
    %314 = arith.negf %313 : vector<1x32xf32>
    %315 = math.exp %314 : vector<1x32xf32>
    %cst_107 = arith.constant 1.000000e+00 : f32
    %316 = vector.broadcast %cst_107 : f32 to vector<1x32xf32>
    %317 = arith.addf %316, %315 : vector<1x32xf32>
    %318 = arith.divf %316, %317 : vector<1x32xf32>
    %319 = arith.mulf %310, %293 : vector<1x32xf32>
    %320 = arith.mulf %304, %312 : vector<1x32xf32>
    %321 = arith.addf %319, %320 : vector<1x32xf32>
    %322 = math.tanh %321 : vector<1x32xf32>
    %323 = arith.mulf %318, %322 : vector<1x32xf32>
    %c1_i32_108 = arith.constant 1 : i32
    %324 = arith.muli %c0_i32_101, %c1_i32_108 : i32
    %325 = arith.index_cast %324 : i32 to index
    %c0_109 = arith.constant 0 : index
    %326 = vector.load %arg15[%325, %c0_109] : memref<8x32xf32, #tpu.memory_space<vmem>>, vector<1x32xf32>
    tpu.vector_store %arg15[%325, %c0_109], %323 {strides = array<i32>} : memref<8x32xf32, #tpu.memory_space<vmem>>, vector<1x32xf32>,
    %c1_i32_110 = arith.constant 1 : i32
    %c1_i32_111 = arith.constant 1 : i32
    %327 = arith.muli %c1_i32_110, %c1_i32_111 : i32
    %328 = arith.index_cast %327 : i32 to index
    %c0_112 = arith.constant 0 : index
    %329 = vector.load %arg14[%328, %c0_112] : memref<8x128xf32, #tpu.memory_space<vmem>>, vector<1x128xf32>
    %cst_113 = arith.constant dense<0.000000e+00> : vector<1x128xf32>
    %330 = tpu.matmul %323, %289, %cst_113 {dimension_numbers = #tpu.dot_dimension_numbers<[1], [0], [0], [1], [0, 0, 1, 1], [], []>} : vector<1x32xf32>, vector<32x128xf32>, vector<1x128xf32> -> vector<1x128xf32>
    %331 = arith.addf %329, %330 : vector<1x128xf32>
    %332 = vector.extract_strided_slice %331 {offsets = [0, 0], sizes = [1, 32], strides = [1, 1]} : vector<1x128xf32> to vector<1x32xf32>
    %333 = arith.negf %332 : vector<1x32xf32>
    %334 = math.exp %333 : vector<1x32xf32>
    %cst_114 = arith.constant 1.000000e+00 : f32
    %335 = vector.broadcast %cst_114 : f32 to vector<1x32xf32>
    %336 = arith.addf %335, %334 : vector<1x32xf32>
    %337 = arith.divf %335, %336 : vector<1x32xf32>
    %338 = vector.extract_strided_slice %331 {offsets = [0, 32], sizes = [1, 32], strides = [1, 1]} : vector<1x128xf32> to vector<1x32xf32>
    %339 = arith.negf %338 : vector<1x32xf32>
    %340 = math.exp %339 : vector<1x32xf32>
    %cst_115 = arith.constant 1.000000e+00 : f32
    %341 = vector.broadcast %cst_115 : f32 to vector<1x32xf32>
    %342 = arith.addf %341, %340 : vector<1x32xf32>
    %343 = arith.divf %341, %342 : vector<1x32xf32>
    %344 = vector.extract_strided_slice %331 {offsets = [0, 64], sizes = [1, 32], strides = [1, 1]} : vector<1x128xf32> to vector<1x32xf32>
    %345 = math.tanh %344 : vector<1x32xf32>
    %346 = vector.extract_strided_slice %331 {offsets = [0, 96], sizes = [1, 32], strides = [1, 1]} : vector<1x128xf32> to vector<1x32xf32>
    %347 = arith.negf %346 : vector<1x32xf32>
    %348 = math.exp %347 : vector<1x32xf32>
    %cst_116 = arith.constant 1.000000e+00 : f32
    %349 = vector.broadcast %cst_116 : f32 to vector<1x32xf32>
    %350 = arith.addf %349, %348 : vector<1x32xf32>
    %351 = arith.divf %349, %350 : vector<1x32xf32>
    %352 = arith.mulf %343, %321 : vector<1x32xf32>
    %353 = arith.mulf %337, %345 : vector<1x32xf32>
    %354 = arith.addf %352, %353 : vector<1x32xf32>
    %355 = math.tanh %354 : vector<1x32xf32>
    %356 = arith.mulf %351, %355 : vector<1x32xf32>
    %c1_i32_117 = arith.constant 1 : i32
    %357 = arith.muli %c1_i32_110, %c1_i32_117 : i32
    %358 = arith.index_cast %357 : i32 to index
    %c0_118 = arith.constant 0 : index
    %359 = vector.load %arg15[%358, %c0_118] : memref<8x32xf32, #tpu.memory_space<vmem>>, vector<1x32xf32>
    tpu.vector_store %arg15[%358, %c0_118], %356 {strides = array<i32>} : memref<8x32xf32, #tpu.memory_space<vmem>>, vector<1x32xf32>,
    %c2_i32_119 = arith.constant 2 : i32
    %c1_i32_120 = arith.constant 1 : i32
    %360 = arith.muli %c2_i32_119, %c1_i32_120 : i32
    %361 = arith.index_cast %360 : i32 to index
    %c0_121 = arith.constant 0 : index
    %362 = vector.load %arg14[%361, %c0_121] : memref<8x128xf32, #tpu.memory_space<vmem>>, vector<1x128xf32>
    %cst_122 = arith.constant dense<0.000000e+00> : vector<1x128xf32>
    %363 = tpu.matmul %356, %289, %cst_122 {dimension_numbers = #tpu.dot_dimension_numbers<[1], [0], [0], [1], [0, 0, 1, 1], [], []>} : vector<1x32xf32>, vector<32x128xf32>, vector<1x128xf32> -> vector<1x128xf32>
    %364 = arith.addf %362, %363 : vector<1x128xf32>
    %365 = vector.extract_strided_slice %364 {offsets = [0, 0], sizes = [1, 32], strides = [1, 1]} : vector<1x128xf32> to vector<1x32xf32>
    %366 = arith.negf %365 : vector<1x32xf32>
    %367 = math.exp %366 : vector<1x32xf32>
    %cst_123 = arith.constant 1.000000e+00 : f32
    %368 = vector.broadcast %cst_123 : f32 to vector<1x32xf32>
    %369 = arith.addf %368, %367 : vector<1x32xf32>
    %370 = arith.divf %368, %369 : vector<1x32xf32>
    %371 = vector.extract_strided_slice %364 {offsets = [0, 32], sizes = [1, 32], strides = [1, 1]} : vector<1x128xf32> to vector<1x32xf32>
    %372 = arith.negf %371 : vector<1x32xf32>
    %373 = math.exp %372 : vector<1x32xf32>
    %cst_124 = arith.constant 1.000000e+00 : f32
    %374 = vector.broadcast %cst_124 : f32 to vector<1x32xf32>
    %375 = arith.addf %374, %373 : vector<1x32xf32>
    %376 = arith.divf %374, %375 : vector<1x32xf32>
    %377 = vector.extract_strided_slice %364 {offsets = [0, 64], sizes = [1, 32], strides = [1, 1]} : vector<1x128xf32> to vector<1x32xf32>
    %378 = math.tanh %377 : vector<1x32xf32>
    %379 = vector.extract_strided_slice %364 {offsets = [0, 96], sizes = [1, 32], strides = [1, 1]} : vector<1x128xf32> to vector<1x32xf32>
    %380 = arith.negf %379 : vector<1x32xf32>
    %381 = math.exp %380 : vector<1x32xf32>
    %cst_125 = arith.constant 1.000000e+00 : f32
    %382 = vector.broadcast %cst_125 : f32 to vector<1x32xf32>
    %383 = arith.addf %382, %381 : vector<1x32xf32>
    %384 = arith.divf %382, %383 : vector<1x32xf32>
    %385 = arith.mulf %376, %354 : vector<1x32xf32>
    %386 = arith.mulf %370, %378 : vector<1x32xf32>
    %387 = arith.addf %385, %386 : vector<1x32xf32>
    %388 = math.tanh %387 : vector<1x32xf32>
    %389 = arith.mulf %384, %388 : vector<1x32xf32>
    %c1_i32_126 = arith.constant 1 : i32
    %390 = arith.muli %c2_i32_119, %c1_i32_126 : i32
    %391 = arith.index_cast %390 : i32 to index
    %c0_127 = arith.constant 0 : index
    %392 = vector.load %arg15[%391, %c0_127] : memref<8x32xf32, #tpu.memory_space<vmem>>, vector<1x32xf32>
    tpu.vector_store %arg15[%391, %c0_127], %389 {strides = array<i32>} : memref<8x32xf32, #tpu.memory_space<vmem>>, vector<1x32xf32>,
    %c3_i32_128 = arith.constant 3 : i32
    %c1_i32_129 = arith.constant 1 : i32
    %393 = arith.muli %c3_i32_128, %c1_i32_129 : i32
    %394 = arith.index_cast %393 : i32 to index
    %c0_130 = arith.constant 0 : index
    %395 = vector.load %arg14[%394, %c0_130] : memref<8x128xf32, #tpu.memory_space<vmem>>, vector<1x128xf32>
    %cst_131 = arith.constant dense<0.000000e+00> : vector<1x128xf32>
    %396 = tpu.matmul %389, %289, %cst_131 {dimension_numbers = #tpu.dot_dimension_numbers<[1], [0], [0], [1], [0, 0, 1, 1], [], []>} : vector<1x32xf32>, vector<32x128xf32>, vector<1x128xf32> -> vector<1x128xf32>
    %397 = arith.addf %395, %396 : vector<1x128xf32>
    %398 = vector.extract_strided_slice %397 {offsets = [0, 0], sizes = [1, 32], strides = [1, 1]} : vector<1x128xf32> to vector<1x32xf32>
    %399 = arith.negf %398 : vector<1x32xf32>
    %400 = math.exp %399 : vector<1x32xf32>
    %cst_132 = arith.constant 1.000000e+00 : f32
    %401 = vector.broadcast %cst_132 : f32 to vector<1x32xf32>
    %402 = arith.addf %401, %400 : vector<1x32xf32>
    %403 = arith.divf %401, %402 : vector<1x32xf32>
    %404 = vector.extract_strided_slice %397 {offsets = [0, 32], sizes = [1, 32], strides = [1, 1]} : vector<1x128xf32> to vector<1x32xf32>
    %405 = arith.negf %404 : vector<1x32xf32>
    %406 = math.exp %405 : vector<1x32xf32>
    %cst_133 = arith.constant 1.000000e+00 : f32
    %407 = vector.broadcast %cst_133 : f32 to vector<1x32xf32>
    %408 = arith.addf %407, %406 : vector<1x32xf32>
    %409 = arith.divf %407, %408 : vector<1x32xf32>
    %410 = vector.extract_strided_slice %397 {offsets = [0, 64], sizes = [1, 32], strides = [1, 1]} : vector<1x128xf32> to vector<1x32xf32>
    %411 = math.tanh %410 : vector<1x32xf32>
    %412 = vector.extract_strided_slice %397 {offsets = [0, 96], sizes = [1, 32], strides = [1, 1]} : vector<1x128xf32> to vector<1x32xf32>
    %413 = arith.negf %412 : vector<1x32xf32>
    %414 = math.exp %413 : vector<1x32xf32>
    %cst_134 = arith.constant 1.000000e+00 : f32
    %415 = vector.broadcast %cst_134 : f32 to vector<1x32xf32>
    %416 = arith.addf %415, %414 : vector<1x32xf32>
    %417 = arith.divf %415, %416 : vector<1x32xf32>
    %418 = arith.mulf %409, %387 : vector<1x32xf32>
    %419 = arith.mulf %403, %411 : vector<1x32xf32>
    %420 = arith.addf %418, %419 : vector<1x32xf32>
    %421 = math.tanh %420 : vector<1x32xf32>
    %422 = arith.mulf %417, %421 : vector<1x32xf32>
    %c1_i32_135 = arith.constant 1 : i32
    %423 = arith.muli %c3_i32_128, %c1_i32_135 : i32
    %424 = arith.index_cast %423 : i32 to index
    %c0_136 = arith.constant 0 : index
    %425 = vector.load %arg15[%424, %c0_136] : memref<8x32xf32, #tpu.memory_space<vmem>>, vector<1x32xf32>
    tpu.vector_store %arg15[%424, %c0_136], %422 {strides = array<i32>} : memref<8x32xf32, #tpu.memory_space<vmem>>, vector<1x32xf32>,
    %c4_i32_137 = arith.constant 4 : i32
    %c1_i32_138 = arith.constant 1 : i32
    %426 = arith.muli %c4_i32_137, %c1_i32_138 : i32
    %427 = arith.index_cast %426 : i32 to index
    %c0_139 = arith.constant 0 : index
    %428 = vector.load %arg14[%427, %c0_139] : memref<8x128xf32, #tpu.memory_space<vmem>>, vector<1x128xf32>
    %cst_140 = arith.constant dense<0.000000e+00> : vector<1x128xf32>
    %429 = tpu.matmul %422, %289, %cst_140 {dimension_numbers = #tpu.dot_dimension_numbers<[1], [0], [0], [1], [0, 0, 1, 1], [], []>} : vector<1x32xf32>, vector<32x128xf32>, vector<1x128xf32> -> vector<1x128xf32>
    %430 = arith.addf %428, %429 : vector<1x128xf32>
    %431 = vector.extract_strided_slice %430 {offsets = [0, 0], sizes = [1, 32], strides = [1, 1]} : vector<1x128xf32> to vector<1x32xf32>
    %432 = arith.negf %431 : vector<1x32xf32>
    %433 = math.exp %432 : vector<1x32xf32>
    %cst_141 = arith.constant 1.000000e+00 : f32
    %434 = vector.broadcast %cst_141 : f32 to vector<1x32xf32>
    %435 = arith.addf %434, %433 : vector<1x32xf32>
    %436 = arith.divf %434, %435 : vector<1x32xf32>
    %437 = vector.extract_strided_slice %430 {offsets = [0, 32], sizes = [1, 32], strides = [1, 1]} : vector<1x128xf32> to vector<1x32xf32>
    %438 = arith.negf %437 : vector<1x32xf32>
    %439 = math.exp %438 : vector<1x32xf32>
    %cst_142 = arith.constant 1.000000e+00 : f32
    %440 = vector.broadcast %cst_142 : f32 to vector<1x32xf32>
    %441 = arith.addf %440, %439 : vector<1x32xf32>
    %442 = arith.divf %440, %441 : vector<1x32xf32>
    %443 = vector.extract_strided_slice %430 {offsets = [0, 64], sizes = [1, 32], strides = [1, 1]} : vector<1x128xf32> to vector<1x32xf32>
    %444 = math.tanh %443 : vector<1x32xf32>
    %445 = vector.extract_strided_slice %430 {offsets = [0, 96], sizes = [1, 32], strides = [1, 1]} : vector<1x128xf32> to vector<1x32xf32>
    %446 = arith.negf %445 : vector<1x32xf32>
    %447 = math.exp %446 : vector<1x32xf32>
    %cst_143 = arith.constant 1.000000e+00 : f32
    %448 = vector.broadcast %cst_143 : f32 to vector<1x32xf32>
    %449 = arith.addf %448, %447 : vector<1x32xf32>
    %450 = arith.divf %448, %449 : vector<1x32xf32>
    %451 = arith.mulf %442, %420 : vector<1x32xf32>
    %452 = arith.mulf %436, %444 : vector<1x32xf32>
    %453 = arith.addf %451, %452 : vector<1x32xf32>
    %454 = math.tanh %453 : vector<1x32xf32>
    %455 = arith.mulf %450, %454 : vector<1x32xf32>
    %c1_i32_144 = arith.constant 1 : i32
    %456 = arith.muli %c4_i32_137, %c1_i32_144 : i32
    %457 = arith.index_cast %456 : i32 to index
    %c0_145 = arith.constant 0 : index
    %458 = vector.load %arg15[%457, %c0_145] : memref<8x32xf32, #tpu.memory_space<vmem>>, vector<1x32xf32>
    tpu.vector_store %arg15[%457, %c0_145], %455 {strides = array<i32>} : memref<8x32xf32, #tpu.memory_space<vmem>>, vector<1x32xf32>,
    %c5_i32_146 = arith.constant 5 : i32
    %c1_i32_147 = arith.constant 1 : i32
    %459 = arith.muli %c5_i32_146, %c1_i32_147 : i32
    %460 = arith.index_cast %459 : i32 to index
    %c0_148 = arith.constant 0 : index
    %461 = vector.load %arg14[%460, %c0_148] : memref<8x128xf32, #tpu.memory_space<vmem>>, vector<1x128xf32>
    %cst_149 = arith.constant dense<0.000000e+00> : vector<1x128xf32>
    %462 = tpu.matmul %455, %289, %cst_149 {dimension_numbers = #tpu.dot_dimension_numbers<[1], [0], [0], [1], [0, 0, 1, 1], [], []>} : vector<1x32xf32>, vector<32x128xf32>, vector<1x128xf32> -> vector<1x128xf32>
    %463 = arith.addf %461, %462 : vector<1x128xf32>
    %464 = vector.extract_strided_slice %463 {offsets = [0, 0], sizes = [1, 32], strides = [1, 1]} : vector<1x128xf32> to vector<1x32xf32>
    %465 = arith.negf %464 : vector<1x32xf32>
    %466 = math.exp %465 : vector<1x32xf32>
    %cst_150 = arith.constant 1.000000e+00 : f32
    %467 = vector.broadcast %cst_150 : f32 to vector<1x32xf32>
    %468 = arith.addf %467, %466 : vector<1x32xf32>
    %469 = arith.divf %467, %468 : vector<1x32xf32>
    %470 = vector.extract_strided_slice %463 {offsets = [0, 32], sizes = [1, 32], strides = [1, 1]} : vector<1x128xf32> to vector<1x32xf32>
    %471 = arith.negf %470 : vector<1x32xf32>
    %472 = math.exp %471 : vector<1x32xf32>
    %cst_151 = arith.constant 1.000000e+00 : f32
    %473 = vector.broadcast %cst_151 : f32 to vector<1x32xf32>
    %474 = arith.addf %473, %472 : vector<1x32xf32>
    %475 = arith.divf %473, %474 : vector<1x32xf32>
    %476 = vector.extract_strided_slice %463 {offsets = [0, 64], sizes = [1, 32], strides = [1, 1]} : vector<1x128xf32> to vector<1x32xf32>
    %477 = math.tanh %476 : vector<1x32xf32>
    %478 = vector.extract_strided_slice %463 {offsets = [0, 96], sizes = [1, 32], strides = [1, 1]} : vector<1x128xf32> to vector<1x32xf32>
    %479 = arith.negf %478 : vector<1x32xf32>
    %480 = math.exp %479 : vector<1x32xf32>
    %cst_152 = arith.constant 1.000000e+00 : f32
    %481 = vector.broadcast %cst_152 : f32 to vector<1x32xf32>
    %482 = arith.addf %481, %480 : vector<1x32xf32>
    %483 = arith.divf %481, %482 : vector<1x32xf32>
    %484 = arith.mulf %475, %453 : vector<1x32xf32>
    %485 = arith.mulf %469, %477 : vector<1x32xf32>
    %486 = arith.addf %484, %485 : vector<1x32xf32>
    %487 = math.tanh %486 : vector<1x32xf32>
    %488 = arith.mulf %483, %487 : vector<1x32xf32>
    %c1_i32_153 = arith.constant 1 : i32
    %489 = arith.muli %c5_i32_146, %c1_i32_153 : i32
    %490 = arith.index_cast %489 : i32 to index
    %c0_154 = arith.constant 0 : index
    %491 = vector.load %arg15[%490, %c0_154] : memref<8x32xf32, #tpu.memory_space<vmem>>, vector<1x32xf32>
    tpu.vector_store %arg15[%490, %c0_154], %488 {strides = array<i32>} : memref<8x32xf32, #tpu.memory_space<vmem>>, vector<1x32xf32>,
    %c6_i32_155 = arith.constant 6 : i32
    %c1_i32_156 = arith.constant 1 : i32
    %492 = arith.muli %c6_i32_155, %c1_i32_156 : i32
    %493 = arith.index_cast %492 : i32 to index
    %c0_157 = arith.constant 0 : index
    %494 = vector.load %arg14[%493, %c0_157] : memref<8x128xf32, #tpu.memory_space<vmem>>, vector<1x128xf32>
    %cst_158 = arith.constant dense<0.000000e+00> : vector<1x128xf32>
    %495 = tpu.matmul %488, %289, %cst_158 {dimension_numbers = #tpu.dot_dimension_numbers<[1], [0], [0], [1], [0, 0, 1, 1], [], []>} : vector<1x32xf32>, vector<32x128xf32>, vector<1x128xf32> -> vector<1x128xf32>
    %496 = arith.addf %494, %495 : vector<1x128xf32>
    %497 = vector.extract_strided_slice %496 {offsets = [0, 0], sizes = [1, 32], strides = [1, 1]} : vector<1x128xf32> to vector<1x32xf32>
    %498 = arith.negf %497 : vector<1x32xf32>
    %499 = math.exp %498 : vector<1x32xf32>
    %cst_159 = arith.constant 1.000000e+00 : f32
    %500 = vector.broadcast %cst_159 : f32 to vector<1x32xf32>
    %501 = arith.addf %500, %499 : vector<1x32xf32>
    %502 = arith.divf %500, %501 : vector<1x32xf32>
    %503 = vector.extract_strided_slice %496 {offsets = [0, 32], sizes = [1, 32], strides = [1, 1]} : vector<1x128xf32> to vector<1x32xf32>
    %504 = arith.negf %503 : vector<1x32xf32>
    %505 = math.exp %504 : vector<1x32xf32>
    %cst_160 = arith.constant 1.000000e+00 : f32
    %506 = vector.broadcast %cst_160 : f32 to vector<1x32xf32>
    %507 = arith.addf %506, %505 : vector<1x32xf32>
    %508 = arith.divf %506, %507 : vector<1x32xf32>
    %509 = vector.extract_strided_slice %496 {offsets = [0, 64], sizes = [1, 32], strides = [1, 1]} : vector<1x128xf32> to vector<1x32xf32>
    %510 = math.tanh %509 : vector<1x32xf32>
    %511 = vector.extract_strided_slice %496 {offsets = [0, 96], sizes = [1, 32], strides = [1, 1]} : vector<1x128xf32> to vector<1x32xf32>
    %512 = arith.negf %511 : vector<1x32xf32>
    %513 = math.exp %512 : vector<1x32xf32>
    %cst_161 = arith.constant 1.000000e+00 : f32
    %514 = vector.broadcast %cst_161 : f32 to vector<1x32xf32>
    %515 = arith.addf %514, %513 : vector<1x32xf32>
    %516 = arith.divf %514, %515 : vector<1x32xf32>
    %517 = arith.mulf %508, %486 : vector<1x32xf32>
    %518 = arith.mulf %502, %510 : vector<1x32xf32>
    %519 = arith.addf %517, %518 : vector<1x32xf32>
    %520 = math.tanh %519 : vector<1x32xf32>
    %521 = arith.mulf %516, %520 : vector<1x32xf32>
    %c1_i32_162 = arith.constant 1 : i32
    %522 = arith.muli %c6_i32_155, %c1_i32_162 : i32
    %523 = arith.index_cast %522 : i32 to index
    %c0_163 = arith.constant 0 : index
    %524 = vector.load %arg15[%523, %c0_163] : memref<8x32xf32, #tpu.memory_space<vmem>>, vector<1x32xf32>
    tpu.vector_store %arg15[%523, %c0_163], %521 {strides = array<i32>} : memref<8x32xf32, #tpu.memory_space<vmem>>, vector<1x32xf32>,
    %c7_i32_164 = arith.constant 7 : i32
    %c1_i32_165 = arith.constant 1 : i32
    %525 = arith.muli %c7_i32_164, %c1_i32_165 : i32
    %526 = arith.index_cast %525 : i32 to index
    %c0_166 = arith.constant 0 : index
    %527 = vector.load %arg14[%526, %c0_166] : memref<8x128xf32, #tpu.memory_space<vmem>>, vector<1x128xf32>
    %cst_167 = arith.constant dense<0.000000e+00> : vector<1x128xf32>
    %528 = tpu.matmul %521, %289, %cst_167 {dimension_numbers = #tpu.dot_dimension_numbers<[1], [0], [0], [1], [0, 0, 1, 1], [], []>} : vector<1x32xf32>, vector<32x128xf32>, vector<1x128xf32> -> vector<1x128xf32>
    %529 = arith.addf %527, %528 : vector<1x128xf32>
    %530 = vector.extract_strided_slice %529 {offsets = [0, 0], sizes = [1, 32], strides = [1, 1]} : vector<1x128xf32> to vector<1x32xf32>
    %531 = arith.negf %530 : vector<1x32xf32>
    %532 = math.exp %531 : vector<1x32xf32>
    %cst_168 = arith.constant 1.000000e+00 : f32
    %533 = vector.broadcast %cst_168 : f32 to vector<1x32xf32>
    %534 = arith.addf %533, %532 : vector<1x32xf32>
    %535 = arith.divf %533, %534 : vector<1x32xf32>
    %536 = vector.extract_strided_slice %529 {offsets = [0, 32], sizes = [1, 32], strides = [1, 1]} : vector<1x128xf32> to vector<1x32xf32>
    %537 = arith.negf %536 : vector<1x32xf32>
    %538 = math.exp %537 : vector<1x32xf32>
    %cst_169 = arith.constant 1.000000e+00 : f32
    %539 = vector.broadcast %cst_169 : f32 to vector<1x32xf32>
    %540 = arith.addf %539, %538 : vector<1x32xf32>
    %541 = arith.divf %539, %540 : vector<1x32xf32>
    %542 = vector.extract_strided_slice %529 {offsets = [0, 64], sizes = [1, 32], strides = [1, 1]} : vector<1x128xf32> to vector<1x32xf32>
    %543 = math.tanh %542 : vector<1x32xf32>
    %544 = vector.extract_strided_slice %529 {offsets = [0, 96], sizes = [1, 32], strides = [1, 1]} : vector<1x128xf32> to vector<1x32xf32>
    %545 = arith.negf %544 : vector<1x32xf32>
    %546 = math.exp %545 : vector<1x32xf32>
    %cst_170 = arith.constant 1.000000e+00 : f32
    %547 = vector.broadcast %cst_170 : f32 to vector<1x32xf32>
    %548 = arith.addf %547, %546 : vector<1x32xf32>
    %549 = arith.divf %547, %548 : vector<1x32xf32>
    %550 = arith.mulf %541, %519 : vector<1x32xf32>
    %551 = arith.mulf %535, %543 : vector<1x32xf32>
    %552 = arith.addf %550, %551 : vector<1x32xf32>
    %553 = math.tanh %552 : vector<1x32xf32>
    %554 = arith.mulf %549, %553 : vector<1x32xf32>
    %c1_i32_171 = arith.constant 1 : i32
    %555 = arith.muli %c7_i32_164, %c1_i32_171 : i32
    %556 = arith.index_cast %555 : i32 to index
    %c0_172 = arith.constant 0 : index
    %557 = vector.load %arg15[%556, %c0_172] : memref<8x32xf32, #tpu.memory_space<vmem>>, vector<1x32xf32>
    tpu.vector_store %arg15[%556, %c0_172], %554 {strides = array<i32>} : memref<8x32xf32, #tpu.memory_space<vmem>>, vector<1x32xf32>,
    %c8_i32_173 = arith.constant 8 : i32
    %c1_174 = arith.constant 1 : index
    %c0_175 = arith.constant 0 : index
    %c0_176 = arith.constant 0 : index
    %558 = vector.load %arg12[%c1_174, %c0_175, %c0_176] : memref<2x1x32xf32, #tpu.memory_space<vmem>>, vector<1x1x32xf32>
    %559 = vector.shape_cast %558 : vector<1x1x32xf32> to vector<1x32xf32>
    %560 = vector.shape_cast %554 : vector<1x32xf32> to vector<1x1x32xf32>
    tpu.vector_store %arg12[%c1_174, %c0_175, %c0_176], %560 {strides = array<i32>} : memref<2x1x32xf32, #tpu.memory_space<vmem>>, vector<1x1x32xf32>,
    %c1_177 = arith.constant 1 : index
    %c0_178 = arith.constant 0 : index
    %c0_179 = arith.constant 0 : index
    %561 = vector.load %arg13[%c1_177, %c0_178, %c0_179] : memref<2x1x32xf32, #tpu.memory_space<vmem>>, vector<1x1x32xf32>
    %562 = vector.shape_cast %561 : vector<1x1x32xf32> to vector<1x32xf32>
    %563 = vector.shape_cast %552 : vector<1x32xf32> to vector<1x1x32xf32>
    tpu.vector_store %arg13[%c1_177, %c0_178, %c0_179], %563 {strides = array<i32>} : memref<2x1x32xf32, #tpu.memory_space<vmem>>, vector<1x1x32xf32>,
    %c0_180 = arith.constant 0 : index
    %c0_181 = arith.constant 0 : index
    %564 = vector.load %arg15[%c0_180, %c0_181] : memref<8x32xf32, #tpu.memory_space<vmem>>, vector<8x32xf32>
    %c0_182 = arith.constant 0 : index
    %c0_183 = arith.constant 0 : index
    %565 = vector.load %arg7[%c0_182, %c0_183] : memref<32x17xf32, #tpu.memory_space<vmem>>, vector<32x17xf32>
    %cst_184 = arith.constant dense<0.000000e+00> : vector<8x17xf32>
    %566 = tpu.matmul %564, %565, %cst_184 {dimension_numbers = #tpu.dot_dimension_numbers<[1], [0], [0], [1], [0, 0, 1, 1], [], []>} : vector<8x32xf32>, vector<32x17xf32>, vector<8x17xf32> -> vector<8x17xf32>
    %c0_185 = arith.constant 0 : index
    %c0_186 = arith.constant 0 : index
    %567 = vector.load %arg8[%c0_185, %c0_186] : memref<1x17xf32, #tpu.memory_space<vmem>>, vector<1x17xf32>
    %568 = vector.broadcast %567 : vector<1x17xf32> to vector<8x17xf32>
    %569 = arith.addf %566, %568 : vector<8x17xf32>
    %570 = arith.negf %569 : vector<8x17xf32>
    %571 = math.exp %570 : vector<8x17xf32>
    %cst_187 = arith.constant 1.000000e+00 : f32
    %572 = vector.broadcast %cst_187 : f32 to vector<8x17xf32>
    %573 = arith.addf %572, %571 : vector<8x17xf32>
    %574 = arith.divf %572, %573 : vector<8x17xf32>
    %c0_188 = arith.constant 0 : index
    %c0_189 = arith.constant 0 : index
    %575 = vector.load %arg11[%c0_188, %c0_189] : memref<8x17xf32, #tpu.memory_space<vmem>>, vector<8x17xf32>
    tpu.vector_store %arg11[%c0_188, %c0_189], %574 {strides = array<i32>} : memref<8x17xf32, #tpu.memory_space<vmem>>, vector<8x17xf32>,
    return
  }
}

</mosaic_0001>

<llo_original>
// kernel: my_lstm_forward.1
$region0: #{my_lstm_forward.1}
  #allocation0 [shape = 'u32[]', space=smem, size = 0x4, offset = 0x4, fixed_abs, tag = 'smem constant byte address 0x4 - core index']
  #allocation1 [shape = 'u32[144,128]{1,0:T(1,128)}', space=vmem, size = 0x12000, scoped, tag = 'internal scratch']
  #allocation2 [shape = 'f32[8,128]{1,0:T(8,128)}', space=vmem, size = 0x1000, scoped, tag = 'scratch operand']
  #allocation3 [shape = 'f32[8,32]{1,0:T(8,128)}', space=vmem, size = 0x1000, scoped, tag = 'scratch operand']
  %s0 = inlined_call_operand.vmem [shape: f32[8,16], index: 0, kind: input, shape index: {}]
  %s1 = inlined_call_operand.hbm [shape: f32[16,128], index: 1, kind: input, shape index: {}]
  %s2 = inlined_call_operand.vmem [shape: f32[32,128], index: 2, kind: input, shape index: {}]
  %s3 = inlined_call_operand.hbm [shape: f32[1,128], index: 3, kind: input, shape index: {}]
  %s4 = inlined_call_operand.vmem [shape: f32[32,128], index: 4, kind: input, shape index: {}]
  %s5 = inlined_call_operand.hbm [shape: f32[32,128], index: 5, kind: input, shape index: {}]
  %s6 = inlined_call_operand.hbm [shape: f32[1,128], index: 6, kind: input, shape index: {}]
  %s7 = inlined_call_operand.vmem [shape: f32[32,17], index: 7, kind: input, shape index: {}]
  %s8 = inlined_call_operand.hbm [shape: f32[1,17], index: 8, kind: input, shape index: {}]
  %s9 = inlined_call_operand.vmem [shape: f32[2,1,32], index: 9, kind: input, shape index: {}]
  %s10 = inlined_call_operand.vmem [shape: f32[2,1,32], index: 10, kind: input, shape index: {}]
  %s11 = inlined_call_operand.hbm [shape: f32[8,17], index: 11, kind: output, shape index: {0}]
  %s12 = inlined_call_operand.hbm [shape: f32[2,1,32], index: 12, kind: output, shape index: {1}]
  %s13 = inlined_call_operand.hbm [shape: f32[2,1,32], index: 13, kind: output, shape index: {2}]
  %14 = xla_tuple %s11, %s12, %s13
  %s15 = sld [smem:[#allocation0]]
  $region90: #{my_lstm_forward.1} parent=0
    _
  %s17 = ssub.s32 1, %s15
  %s18 = scalar_select 0, %s17, %s15
  $region1: #{my_lstm_forward.1} parent=0
    #allocation4 [shape = 'u8[8192]{0}', space=vmem, size = 0x2000, scoped, tag = 'input window, operand 1, single buffered']
    #allocation5 [shape = 's32[1]{0}', space=sflag, size = 0x4, scoped, tag = 'scoped memory for my_lstm_forward.1']
    #allocation6 [shape = 's32[1]{0}', space=sflag, size = 0x4, scoped, tag = 'scoped memory for my_lstm_forward.1']
    #allocation7 [shape = 'u8[512]{0}', space=vmem, size = 0x400, scoped, tag = 'input window, operand 3, single buffered']
    #allocation8 [shape = 's32[1]{0}', space=sflag, size = 0x4, scoped, tag = 'scoped memory for my_lstm_forward.1']
    #allocation9 [shape = 'u8[16384]{0}', space=vmem, size = 0x4000, scoped, tag = 'input window, operand 5, single buffered']
    #allocation10 [shape = 'u8[512]{0}', space=vmem, size = 0x400, scoped, tag = 'input window, operand 6, single buffered']
    #allocation11 [shape = 's32[1]{0}', space=sflag, size = 0x4, scoped, tag = 'scoped memory for my_lstm_forward.1']
    #allocation12 [shape = 'u8[512]{0}', space=vmem, size = 0x400, scoped, tag = 'input window, operand 8, single buffered']
    #allocation13 [shape = 'u8[4096]{0}', space=vmem, size = 0x1000, scoped, tag = 'output window, operand 0, single buffered']
    #allocation14 [shape = 'u8[1024]{0}', space=vmem, size = 0x400, scoped, tag = 'output window, operand 1, single buffered']
    #allocation15 [shape = 's32[1]{0}', space=sflag, size = 0x4, scoped, tag = 'scoped memory for my_lstm_forward.1']
    #allocation16 [shape = 'u8[1024]{0}', space=vmem, size = 0x400, scoped, tag = 'output window, operand 2, single buffered']
    %19 = vsyncpa [#allocation5], 0
    %20 = vsyncpa [#allocation8], 0
    %21 = vsyncpa [#allocation11], 0
    %22 = vsyncpa [#allocation6], 0
    %23 = vsyncpa [#allocation15], 0
    // Predicated region
    $region2: #{my_lstm_forward.1} parent=1 // pred_check
      _
    $region3: #{my_lstm_forward.1} parent=1 // pred_check_branch
      %25 = sbr.rel (0) target = $region5
    $region4: #{my_lstm_forward.1} parent=1 // pred_region
      _
    $region5: #{my_lstm_forward.1} parent=1 // pred_fallthru
      _
    // Predicated region
    $region6: #{my_lstm_forward.1} parent=1 // pred_check
      _
    $region7: #{my_lstm_forward.1} parent=1 // pred_check_branch
      %27 = sbr.rel (0) target = $region9
    $region8: #{my_lstm_forward.1} parent=1 // pred_region
      %s29 = ssub.s32 256, 256
      %30 = vsyncadd [#allocation5], %s29
      %s31 = sshll.u32 [#allocation4], 4
      %s32 = int_to_ptr.vmem [resolvable:$true] %s31
      %37 = dma.hbm_to_vmem [thread:$0]  %s1, 256, %s32, [#allocation5], 128, 128, 8
    $region9: #{my_lstm_forward.1} parent=1 // pred_fallthru
      _
    // Predicated region
    $region10: #{my_lstm_forward.1} parent=1 // pred_check
      _
    $region11: #{my_lstm_forward.1} parent=1 // pred_check_branch
      %39 = sbr.rel (0) target = $region13
    $region12: #{my_lstm_forward.1} parent=1 // pred_region
      _
    $region13: #{my_lstm_forward.1} parent=1 // pred_fallthru
      _
    // Predicated region
    $region14: #{my_lstm_forward.1} parent=1 // pred_check
      _
    $region15: #{my_lstm_forward.1} parent=1 // pred_check_branch
      %41 = sbr.rel (0) target = $region17
    $region16: #{my_lstm_forward.1} parent=1 // pred_region
      %s43 = ssub.s32 16, 16
      %44 = vsyncadd [#allocation8], %s43
      %s46 = sshll.u32 [#allocation7], 4
      %s47 = int_to_ptr.vmem [resolvable:$true] %s46
      %49 = dma.hbm_to_vmem [thread:$0]  %s3, 16, %s47, [#allocation8]
    $region17: #{my_lstm_forward.1} parent=1 // pred_fallthru
      _
    // Predicated region
    $region18: #{my_lstm_forward.1} parent=1 // pred_check
      _
    $region19: #{my_lstm_forward.1} parent=1 // pred_check_branch
      %51 = sbr.rel (0) target = $region21
    $region20: #{my_lstm_forward.1} parent=1 // pred_region
      _
    $region21: #{my_lstm_forward.1} parent=1 // pred_fallthru
      _
    // Predicated region
    $region22: #{my_lstm_forward.1} parent=1 // pred_check
      _
    $region23: #{my_lstm_forward.1} parent=1 // pred_check_branch
      %53 = sbr.rel (0) target = $region25
    $region24: #{my_lstm_forward.1} parent=1 // pred_region
      %s55 = ssub.s32 512, 512
      %56 = vsyncadd [#allocation8], %s55
      %s57 = sshll.u32 [#allocation9], 4
      %s58 = int_to_ptr.vmem [resolvable:$true] %s57
      %63 = dma.hbm_to_vmem [thread:$0]  %s5, 512, %s58, [#allocation8], 128, 128, 8
    $region25: #{my_lstm_forward.1} parent=1 // pred_fallthru
      _
    // Predicated region
    $region26: #{my_lstm_forward.1} parent=1 // pred_check
      _
    $region27: #{my_lstm_forward.1} parent=1 // pred_check_branch
      %65 = sbr.rel (0) target = $region29
    $region28: #{my_lstm_forward.1} parent=1 // pred_region
      %s67 = ssub.s32 16, 16
      %68 = vsyncadd [#allocation11], %s67
      %s70 = sshll.u32 [#allocation10], 4
      %s71 = int_to_ptr.vmem [resolvable:$true] %s70
      %73 = dma.hbm_to_vmem [thread:$0]  %s6, 16, %s71, [#allocation11]
    $region29: #{my_lstm_forward.1} parent=1 // pred_fallthru
      _
    // Predicated region
    $region30: #{my_lstm_forward.1} parent=1 // pred_check
      _
    $region31: #{my_lstm_forward.1} parent=1 // pred_check_branch
      %75 = sbr.rel (0) target = $region33
    $region32: #{my_lstm_forward.1} parent=1 // pred_region
      _
    $region33: #{my_lstm_forward.1} parent=1 // pred_fallthru
      _
    // Predicated region
    $region34: #{my_lstm_forward.1} parent=1 // pred_check
      _
    $region35: #{my_lstm_forward.1} parent=1 // pred_check_branch
      %77 = sbr.rel (0) target = $region37
    $region36: #{my_lstm_forward.1} parent=1 // pred_region
      %s79 = ssub.s32 16, 16
      %80 = vsyncadd [#allocation11], %s79
      %s82 = sshll.u32 [#allocation12], 4
      %s83 = int_to_ptr.vmem [resolvable:$true] %s82
      %85 = dma.hbm_to_vmem [thread:$0]  %s8, 16, %s83, [#allocation11]
    $region37: #{my_lstm_forward.1} parent=1 // pred_fallthru
      _
    // Predicated region
    $region38: #{my_lstm_forward.1} parent=1 // pred_check
      _
    $region39: #{my_lstm_forward.1} parent=1 // pred_check_branch
      %87 = sbr.rel (0) target = $region41
    $region40: #{my_lstm_forward.1} parent=1 // pred_region
      _
    $region41: #{my_lstm_forward.1} parent=1 // pred_fallthru
      _
    // Predicated region
    $region42: #{my_lstm_forward.1} parent=1 // pred_check
      _
    $region43: #{my_lstm_forward.1} parent=1 // pred_check_branch
      %89 = sbr.rel (0) target = $region45
    $region44: #{my_lstm_forward.1} parent=1 // pred_region
      _
    $region45: #{my_lstm_forward.1} parent=1 // pred_fallthru
      _
    // Predicated region
    $region46: #{my_lstm_forward.1} parent=1 // pred_check
      _
    $region47: #{my_lstm_forward.1} parent=1 // pred_check_branch
      %91 = sbr.rel (0) target = $region49
    $region48: #{my_lstm_forward.1} parent=1 // pred_region
      %92 = dma.done [#allocation5], 256
    $region49: #{my_lstm_forward.1} parent=1 // pred_fallthru
      _
    // Predicated region
    $region50: #{my_lstm_forward.1} parent=1 // pred_check
      _
    $region51: #{my_lstm_forward.1} parent=1 // pred_check_branch
      %94 = sbr.rel (0) target = $region53
    $region52: #{my_lstm_forward.1} parent=1 // pred_region
      %95 = dma.done [#allocation8], 16
    $region53: #{my_lstm_forward.1} parent=1 // pred_fallthru
      _
    // Predicated region
    $region54: #{my_lstm_forward.1} parent=1 // pred_check
      _
    $region55: #{my_lstm_forward.1} parent=1 // pred_check_branch
      %97 = sbr.rel (0) target = $region57
    $region56: #{my_lstm_forward.1} parent=1 // pred_region
      %98 = dma.done [#allocation8], 512
    $region57: #{my_lstm_forward.1} parent=1 // pred_fallthru
      _
    // Predicated region
    $region58: #{my_lstm_forward.1} parent=1 // pred_check
      _
    $region59: #{my_lstm_forward.1} parent=1 // pred_check_branch
      %100 = sbr.rel (0) target = $region61
    $region60: #{my_lstm_forward.1} parent=1 // pred_region
      %101 = dma.done [#allocation11], 16
    $region61: #{my_lstm_forward.1} parent=1 // pred_fallthru
      _
    // Predicated region
    $region62: #{my_lstm_forward.1} parent=1 // pred_check
      _
    $region63: #{my_lstm_forward.1} parent=1 // pred_check_branch
      %103 = sbr.rel (0) target = $region65
    $region64: #{my_lstm_forward.1} parent=1 // pred_region
      %104 = dma.done [#allocation11], 16
    $region65: #{my_lstm_forward.1} parent=1 // pred_fallthru
      _
    %v105 = vld [vmem:[%s0] sm:$0xff]
    %v106 = vld [vmem:[#allocation4] sm:$0xff]
    %v107 = vld [vmem:[#allocation4 + $0x8] sm:$0xff]
    %v108 = vld [vmem:[#allocation7] sm:$0x1]
    %v110 = vlaneseq
    %v111 = vshrl.u32 %v110, 7
    %v112 = vsub.s32 0, %v111
    %v113 = vrot.slane %v108, %v112
    %vm115 = vcmask 130048
    %v117 = vsel %vm115, %v105, 0
    %119 = vmatprep.subr.mxu0 0.0
    %120 = vmatpush1.msra.mxu0 0.0
    %121 = vmatprep.subr.mxu0 0.0
    %122 = vmatpush1.msra.mxu0 0.0
    %123 = vmatprep.subr.mxu0 0.0
    %124 = vmatpush1.msra.mxu0 0.0
    %125 = vmatprep.subr.mxu0 0.0
    %126 = vmatpush1.msra.mxu0 0.0
    %127 = vmatprep.subr.mxu0 0.0
    %128 = vmatpush1.msra.mxu0 0.0
    %129 = vmatprep.subr.mxu0 0.0
    %130 = vmatpush1.msra.mxu0 0.0
    %131 = vmatprep.subr.mxu0 0.0
    %132 = vmatpush1.msra.mxu0 0.0
    %133 = vmatprep.subr.mxu0 0.0
    %134 = vmatpush1.msra.mxu0 0.0
    %135 = vmatprep.subr.mxu0 0.0
    %136 = vmatpush1.msra.mxu0 0.0
    %137 = vmatprep.subr.mxu0 0.0
    %138 = vmatpush1.msra.mxu0 0.0
    %139 = vmatprep.subr.mxu0 0.0
    %140 = vmatpush1.msra.mxu0 0.0
    %141 = vmatprep.subr.mxu0 0.0
    %142 = vmatpush1.msra.mxu0 0.0
    %143 = vmatprep.subr.mxu0 0.0
    %144 = vmatpush1.msra.mxu0 0.0
    %145 = vmatprep.subr.mxu0 0.0
    %146 = vmatpush1.msra.mxu0 0.0
    %147 = vmatprep.subr.mxu0 0.0
    %148 = vmatpush1.msra.mxu0 %v107
    %149 = vmatprep.subr.mxu0 0.0
    %150 = vmatpush1.msra.mxu0 %v106
    %151 = vmatprep.subr.mxu0 0.0
    %152 = vmatpush2.msra.mxu0 0.0
    %153 = vmatprep.subr.mxu0 0.0
    %154 = vmatpush2.msra.mxu0 0.0
    %155 = vmatprep.subr.mxu0 0.0
    %156 = vmatpush2.msra.mxu0 0.0
    %157 = vmatprep.subr.mxu0 0.0
    %158 = vmatpush2.msra.mxu0 0.0
    %159 = vmatprep.subr.mxu0 0.0
    %160 = vmatpush2.msra.mxu0 0.0
    %161 = vmatprep.subr.mxu0 0.0
    %162 = vmatpush2.msra.mxu0 0.0
    %163 = vmatprep.subr.mxu0 0.0
    %164 = vmatpush2.msra.mxu0 0.0
    %165 = vmatprep.subr.mxu0 0.0
    %166 = vmatpush2.msra.mxu0 0.0
    %167 = vmatprep.subr.mxu0 0.0
    %168 = vmatpush2.msra.mxu0 0.0
    %169 = vmatprep.subr.mxu0 0.0
    %170 = vmatpush2.msra.mxu0 0.0
    %171 = vmatprep.subr.mxu0 0.0
    %172 = vmatpush2.msra.mxu0 0.0
    %173 = vmatprep.subr.mxu0 0.0
    %174 = vmatpush2.msra.mxu0 0.0
    %175 = vmatprep.subr.mxu0 0.0
    %176 = vmatpush2.msra.mxu0 0.0
    %177 = vmatprep.subr.mxu0 0.0
    %178 = vmatpush2.msra.mxu0 0.0
    %179 = vmatprep.subr.mxu0 0.0
    %180 = vmatpush2.msra.mxu0 0.0
    %181 = vmatprep.subr.mxu0 0.0
    %182 = vmatpush2.msra.mxu0 0.0
    %183 = vmatprep.mubr.f32.mxu0 0.0
    %184 = vmatmul.mubr.f32.gmra.mxu0 %v117
    %v185 = vpop.f32.mrf.mxu0
    %v186 = vadd.f32 %v113, %v185
    %v187 = vpop.f32.mrf.mxu0
    %188 = vdwg.mxu0
    %189 = vst [vmem:[#allocation2] sm:$0xff] %v186
    %v190 = vld [vmem:[%s2] sm:$0xff]
    %v191 = vld [vmem:[%s2 + $0x8] sm:$0xff]
    %v192 = vld [vmem:[%s2 + $0x10] sm:$0xff]
    %v193 = vld [vmem:[%s2 + $0x18] sm:$0xff]
    %v194 = vld [vmem:[%s9] sm:$0x1]
    %v195 = vld [vmem:[%s10] sm:$0x1]
    %v196 = vld [vmem:[#allocation2] sm:$0x1]
    %vm197 = vcmask 261120
    %v199 = vsel %vm197, %v194, 0
    %201 = vmatprep.subr.mxu0 0.0
    %202 = vmatpush1.msra.mxu0 0.0
    %203 = vmatprep.subr.mxu0 0.0
    %204 = vmatpush1.msra.mxu0 0.0
    %205 = vmatprep.subr.mxu0 0.0
    %206 = vmatpush1.msra.mxu0 0.0
    %207 = vmatprep.subr.mxu0 0.0
    %208 = vmatpush1.msra.mxu0 0.0
    %209 = vmatprep.subr.mxu0 0.0
    %210 = vmatpush1.msra.mxu0 0.0
    %211 = vmatprep.subr.mxu0 0.0
    %212 = vmatpush1.msra.mxu0 0.0
    %213 = vmatprep.subr.mxu0 0.0
    %214 = vmatpush1.msra.mxu0 0.0
    %215 = vmatprep.subr.mxu0 0.0
    %216 = vmatpush1.msra.mxu0 0.0
    %217 = vmatprep.subr.mxu0 0.0
    %218 = vmatpush1.msra.mxu0 0.0
    %219 = vmatprep.subr.mxu0 0.0
    %220 = vmatpush1.msra.mxu0 0.0
    %221 = vmatprep.subr.mxu0 0.0
    %222 = vmatpush1.msra.mxu0 0.0
    %223 = vmatprep.subr.mxu0 0.0
    %224 = vmatpush1.msra.mxu0 0.0
    %225 = vmatprep.subr.mxu0 0.0
    %226 = vmatpush1.msra.mxu0 %v193
    %227 = vmatprep.subr.mxu0 0.0
    %228 = vmatpush1.msra.mxu0 %v192
    %229 = vmatprep.subr.mxu0 0.0
    %230 = vmatpush1.msra.mxu0 %v191
    %231 = vmatprep.subr.mxu0 0.0
    %232 = vmatpush1.msra.mxu0 %v190
    %233 = vmatprep.subr.mxu0 0.0
    %234 = vmatpush2.msra.mxu0 0.0
    %235 = vmatprep.subr.mxu0 0.0
    %236 = vmatpush2.msra.mxu0 0.0
    %237 = vmatprep.subr.mxu0 0.0
    %238 = vmatpush2.msra.mxu0 0.0
    %239 = vmatprep.subr.mxu0 0.0
    %240 = vmatpush2.msra.mxu0 0.0
    %241 = vmatprep.subr.mxu0 0.0
    %242 = vmatpush2.msra.mxu0 0.0
    %243 = vmatprep.subr.mxu0 0.0
    %244 = vmatpush2.msra.mxu0 0.0
    %245 = vmatprep.subr.mxu0 0.0
    %246 = vmatpush2.msra.mxu0 0.0
    %247 = vmatprep.subr.mxu0 0.0
    %248 = vmatpush2.msra.mxu0 0.0
    %249 = vmatprep.subr.mxu0 0.0
    %250 = vmatpush2.msra.mxu0 0.0
    %251 = vmatprep.subr.mxu0 0.0
    %252 = vmatpush2.msra.mxu0 0.0
    %253 = vmatprep.subr.mxu0 0.0
    %254 = vmatpush2.msra.mxu0 0.0
    %255 = vmatprep.subr.mxu0 0.0
    %256 = vmatpush2.msra.mxu0 0.0
    %257 = vmatprep.subr.mxu0 0.0
    %258 = vmatpush2.msra.mxu0 0.0
    %259 = vmatprep.subr.mxu0 0.0
    %260 = vmatpush2.msra.mxu0 0.0
    %261 = vmatprep.subr.mxu0 0.0
    %262 = vmatpush2.msra.mxu0 0.0
    %263 = vmatprep.subr.mxu0 0.0
    %264 = vmatpush2.msra.mxu0 0.0
    %265 = vmatprep.mubr.f32.mxu0 0.0
    %266 = vmatmul.mubr.f32.gmra.mxu0 %v199
    %v267 = vpop.f32.mrf.mxu0
    %v268 = vadd.f32 0.0, %v267
    %v269 = vpop.f32.mrf.mxu0
    %270 = vdwg.mxu0
    %v271 = vadd.f32 %v196, %v268
    %v272 = vxor.u32 %v271, 2147483648
    %v273 = vmul.f32 %v272, 1.442695
    %v274 = vpow.pop %v273
    %v275 = vadd.f32 %v274, 1.0
    %v276 = vrcp.pop %v275
    %v277 = vmul.f32 1.0, %v276
    %v278 = vtanh.pop %v271
    %v280 = vlaneseq
    %v281 = vshrl.u32 %v280, 7
    %v282 = vsub.s32 0, %v281
    %v283 = vrot.slane %v195, %v282
    %284 = vrot.lane.b32.xlu0 %v283, 32
    %v285 = vpop.permute.xlu0 %284
    %v287 = vmul.f32 %v277, %v285
    %289 = vrot.lane.b32.xlu0 %v278, 64
    %v290 = vpop.permute.xlu0 %289
    %v292 = vmul.f32 %v277, %v290
    %294 = vrot.lane.b32.xlu0 %v292, 32
    %v295 = vpop.permute.xlu0 %294
    %v297 = vadd.f32 %v287, %v295
    %v298 = vtanh.pop %v297
    %300 = vrot.lane.b32.xlu0 %v298, 64
    %v301 = vpop.permute.xlu0 %300
    %v303 = vmul.f32 %v277, %v301
    %305 = vrot.lane.b32.xlu0 %v303, 32
    %v306 = vpop.permute.xlu0 %305
    %vm308 = vcmask 253952
    %309 = vst.msk [vmem:[#allocation3] sm:$0x1] %vm308, %v306
    %v310 = vld [vmem:[#allocation2 + $0x1] sm:$0x1]
    %v311 = vsel %vm197, %v306, 0
    %313 = vmatprep.subr.mxu0 0.0
    %314 = vmatpush1.msra.mxu0 0.0
    %315 = vmatprep.subr.mxu0 0.0
    %316 = vmatpush1.msra.mxu0 0.0
    %317 = vmatprep.subr.mxu0 0.0
    %318 = vmatpush1.msra.mxu0 0.0
    %319 = vmatprep.subr.mxu0 0.0
    %320 = vmatpush1.msra.mxu0 0.0
    %321 = vmatprep.subr.mxu0 0.0
    %322 = vmatpush1.msra.mxu0 0.0
    %323 = vmatprep.subr.mxu0 0.0
    %324 = vmatpush1.msra.mxu0 0.0
    %325 = vmatprep.subr.mxu0 0.0
    %326 = vmatpush1.msra.mxu0 0.0
    %327 = vmatprep.subr.mxu0 0.0
    %328 = vmatpush1.msra.mxu0 0.0
    %329 = vmatprep.subr.mxu0 0.0
    %330 = vmatpush1.msra.mxu0 0.0
    %331 = vmatprep.subr.mxu0 0.0
    %332 = vmatpush1.msra.mxu0 0.0
    %333 = vmatprep.subr.mxu0 0.0
    %334 = vmatpush1.msra.mxu0 0.0
    %335 = vmatprep.subr.mxu0 0.0
    %336 = vmatpush1.msra.mxu0 0.0
    %337 = vmatprep.subr.mxu0 0.0
    %338 = vmatpush1.msra.mxu0 %v193
    %339 = vmatprep.subr.mxu0 0.0
    %340 = vmatpush1.msra.mxu0 %v192
    %341 = vmatprep.subr.mxu0 0.0
    %342 = vmatpush1.msra.mxu0 %v191
    %343 = vmatprep.subr.mxu0 0.0
    %344 = vmatpush1.msra.mxu0 %v190
    %345 = vmatprep.subr.mxu0 0.0
    %346 = vmatpush2.msra.mxu0 0.0
    %347 = vmatprep.subr.mxu0 0.0
    %348 = vmatpush2.msra.mxu0 0.0
    %349 = vmatprep.subr.mxu0 0.0
    %350 = vmatpush2.msra.mxu0 0.0
    %351 = vmatprep.subr.mxu0 0.0
    %352 = vmatpush2.msra.mxu0 0.0
    %353 = vmatprep.subr.mxu0 0.0
    %354 = vmatpush2.msra.mxu0 0.0
    %355 = vmatprep.subr.mxu0 0.0
    %356 = vmatpush2.msra.mxu0 0.0
    %357 = vmatprep.subr.mxu0 0.0
    %358 = vmatpush2.msra.mxu0 0.0
    %359 = vmatprep.subr.mxu0 0.0
    %360 = vmatpush2.msra.mxu0 0.0
    %361 = vmatprep.subr.mxu0 0.0
    %362 = vmatpush2.msra.mxu0 0.0
    %363 = vmatprep.subr.mxu0 0.0
    %364 = vmatpush2.msra.mxu0 0.0
    %365 = vmatprep.subr.mxu0 0.0
    %366 = vmatpush2.msra.mxu0 0.0
    %367 = vmatprep.subr.mxu0 0.0
    %368 = vmatpush2.msra.mxu0 0.0
    %369 = vmatprep.subr.mxu0 0.0
    %370 = vmatpush2.msra.mxu0 0.0
    %371 = vmatprep.subr.mxu0 0.0
    %372 = vmatpush2.msra.mxu0 0.0
    %373 = vmatprep.subr.mxu0 0.0
    %374 = vmatpush2.msra.mxu0 0.0
    %375 = vmatprep.subr.mxu0 0.0
    %376 = vmatpush2.msra.mxu0 0.0
    %377 = vmatprep.mubr.f32.mxu0 0.0
    %378 = vmatmul.mubr.f32.gmra.mxu0 %v311
    %v379 = vpop.f32.mrf.mxu0
    %v380 = vadd.f32 0.0, %v379
    %v381 = vpop.f32.mrf.mxu0
    %382 = vdwg.mxu0
    %v383 = vadd.f32 %v310, %v380
    %v384 = vxor.u32 %v383, 2147483648
    %v385 = vmul.f32 %v384, 1.442695
    %v386 = vpow.pop %v385
    %v387 = vadd.f32 %v386, 1.0
    %v388 = vrcp.pop %v387
    %v389 = vmul.f32 1.0, %v388
    %v390 = vtanh.pop %v383
    %v391 = vmul.f32 %v389, %v297
    %393 = vrot.lane.b32.xlu0 %v390, 64
    %v394 = vpop.permute.xlu0 %393
    %v396 = vmul.f32 %v389, %v394
    %398 = vrot.lane.b32.xlu0 %v396, 32
    %v399 = vpop.permute.xlu0 %398
    %v401 = vadd.f32 %v391, %v399
    %v402 = vtanh.pop %v401
    %404 = vrot.lane.b32.xlu0 %v402, 64
    %v405 = vpop.permute.xlu0 %404
    %v407 = vmul.f32 %v389, %v405
    %409 = vrot.lane.b32.xlu0 %v407, 32
    %v410 = vpop.permute.xlu0 %409
    %412 = vst.msk [vmem:[#allocation3 + $0x1] sm:$0x1] %vm308, %v410
    %v413 = vld [vmem:[#allocation2 + $0x2] sm:$0x1]
    %v414 = vsel %vm197, %v410, 0
    %416 = vmatprep.subr.mxu0 0.0
    %417 = vmatpush1.msra.mxu0 0.0
    %418 = vmatprep.subr.mxu0 0.0
    %419 = vmatpush1.msra.mxu0 0.0
    %420 = vmatprep.subr.mxu0 0.0
    %421 = vmatpush1.msra.mxu0 0.0
    %422 = vmatprep.subr.mxu0 0.0
    %423 = vmatpush1.msra.mxu0 0.0
    %424 = vmatprep.subr.mxu0 0.0
    %425 = vmatpush1.msra.mxu0 0.0
    %426 = vmatprep.subr.mxu0 0.0
    %427 = vmatpush1.msra.mxu0 0.0
    %428 = vmatprep.subr.mxu0 0.0
    %429 = vmatpush1.msra.mxu0 0.0
    %430 = vmatprep.subr.mxu0 0.0
    %431 = vmatpush1.msra.mxu0 0.0
    %432 = vmatprep.subr.mxu0 0.0
    %433 = vmatpush1.msra.mxu0 0.0
    %434 = vmatprep.subr.mxu0 0.0
    %435 = vmatpush1.msra.mxu0 0.0
    %436 = vmatprep.subr.mxu0 0.0
    %437 = vmatpush1.msra.mxu0 0.0
    %438 = vmatprep.subr.mxu0 0.0
    %439 = vmatpush1.msra.mxu0 0.0
    %440 = vmatprep.subr.mxu0 0.0
    %441 = vmatpush1.msra.mxu0 %v193
    %442 = vmatprep.subr.mxu0 0.0
    %443 = vmatpush1.msra.mxu0 %v192
    %444 = vmatprep.subr.mxu0 0.0
    %445 = vmatpush1.msra.mxu0 %v191
    %446 = vmatprep.subr.mxu0 0.0
    %447 = vmatpush1.msra.mxu0 %v190
    %448 = vmatprep.subr.mxu0 0.0
    %449 = vmatpush2.msra.mxu0 0.0
    %450 = vmatprep.subr.mxu0 0.0
    %451 = vmatpush2.msra.mxu0 0.0
    %452 = vmatprep.subr.mxu0 0.0
    %453 = vmatpush2.msra.mxu0 0.0
    %454 = vmatprep.subr.mxu0 0.0
    %455 = vmatpush2.msra.mxu0 0.0
    %456 = vmatprep.subr.mxu0 0.0
    %457 = vmatpush2.msra.mxu0 0.0
    %458 = vmatprep.subr.mxu0 0.0
    %459 = vmatpush2.msra.mxu0 0.0
    %460 = vmatprep.subr.mxu0 0.0
    %461 = vmatpush2.msra.mxu0 0.0
    %462 = vmatprep.subr.mxu0 0.0
    %463 = vmatpush2.msra.mxu0 0.0
    %464 = vmatprep.subr.mxu0 0.0
    %465 = vmatpush2.msra.mxu0 0.0
    %466 = vmatprep.subr.mxu0 0.0
    %467 = vmatpush2.msra.mxu0 0.0
    %468 = vmatprep.subr.mxu0 0.0
    %469 = vmatpush2.msra.mxu0 0.0
    %470 = vmatprep.subr.mxu0 0.0
    %471 = vmatpush2.msra.mxu0 0.0
    %472 = vmatprep.subr.mxu0 0.0
    %473 = vmatpush2.msra.mxu0 0.0
    %474 = vmatprep.subr.mxu0 0.0
    %475 = vmatpush2.msra.mxu0 0.0
    %476 = vmatprep.subr.mxu0 0.0
    %477 = vmatpush2.msra.mxu0 0.0
    %478 = vmatprep.subr.mxu0 0.0
    %479 = vmatpush2.msra.mxu0 0.0
    %480 = vmatprep.mubr.f32.mxu0 0.0
    %481 = vmatmul.mubr.f32.gmra.mxu0 %v414
    %v482 = vpop.f32.mrf.mxu0
    %v483 = vadd.f32 0.0, %v482
    %v484 = vpop.f32.mrf.mxu0
    %485 = vdwg.mxu0
    %v486 = vadd.f32 %v413, %v483
    %v487 = vxor.u32 %v486, 2147483648
    %v488 = vmul.f32 %v487, 1.442695
    %v489 = vpow.pop %v488
    %v490 = vadd.f32 %v489, 1.0
    %v491 = vrcp.pop %v490
    %v492 = vmul.f32 1.0, %v491
    %v493 = vtanh.pop %v486
    %v494 = vmul.f32 %v492, %v401
    %496 = vrot.lane.b32.xlu0 %v493, 64
    %v497 = vpop.permute.xlu0 %496
    %v499 = vmul.f32 %v492, %v497
    %501 = vrot.lane.b32.xlu0 %v499, 32
    %v502 = vpop.permute.xlu0 %501
    %v504 = vadd.f32 %v494, %v502
    %v505 = vtanh.pop %v504
    %507 = vrot.lane.b32.xlu0 %v505, 64
    %v508 = vpop.permute.xlu0 %507
    %v510 = vmul.f32 %v492, %v508
    %512 = vrot.lane.b32.xlu0 %v510, 32
    %v513 = vpop.permute.xlu0 %512
    %515 = vst.msk [vmem:[#allocation3 + $0x2] sm:$0x1] %vm308, %v513
    %v516 = vld [vmem:[#allocation2 + $0x3] sm:$0x1]
    %v517 = vsel %vm197, %v513, 0
    %519 = vmatprep.subr.mxu0 0.0
    %520 = vmatpush1.msra.mxu0 0.0
    %521 = vmatprep.subr.mxu0 0.0
    %522 = vmatpush1.msra.mxu0 0.0
    %523 = vmatprep.subr.mxu0 0.0
    %524 = vmatpush1.msra.mxu0 0.0
    %525 = vmatprep.subr.mxu0 0.0
    %526 = vmatpush1.msra.mxu0 0.0
    %527 = vmatprep.subr.mxu0 0.0
    %528 = vmatpush1.msra.mxu0 0.0
    %529 = vmatprep.subr.mxu0 0.0
    %530 = vmatpush1.msra.mxu0 0.0
    %531 = vmatprep.subr.mxu0 0.0
    %532 = vmatpush1.msra.mxu0 0.0
    %533 = vmatprep.subr.mxu0 0.0
    %534 = vmatpush1.msra.mxu0 0.0
    %535 = vmatprep.subr.mxu0 0.0
    %536 = vmatpush1.msra.mxu0 0.0
    %537 = vmatprep.subr.mxu0 0.0
    %538 = vmatpush1.msra.mxu0 0.0
    %539 = vmatprep.subr.mxu0 0.0
    %540 = vmatpush1.msra.mxu0 0.0
    %541 = vmatprep.subr.mxu0 0.0
    %542 = vmatpush1.msra.mxu0 0.0
    %543 = vmatprep.subr.mxu0 0.0
    %544 = vmatpush1.msra.mxu0 %v193
    %545 = vmatprep.subr.mxu0 0.0
    %546 = vmatpush1.msra.mxu0 %v192
    %547 = vmatprep.subr.mxu0 0.0
    %548 = vmatpush1.msra.mxu0 %v191
    %549 = vmatprep.subr.mxu0 0.0
    %550 = vmatpush1.msra.mxu0 %v190
    %551 = vmatprep.subr.mxu0 0.0
    %552 = vmatpush2.msra.mxu0 0.0
    %553 = vmatprep.subr.mxu0 0.0
    %554 = vmatpush2.msra.mxu0 0.0
    %555 = vmatprep.subr.mxu0 0.0
    %556 = vmatpush2.msra.mxu0 0.0
    %557 = vmatprep.subr.mxu0 0.0
    %558 = vmatpush2.msra.mxu0 0.0
    %559 = vmatprep.subr.mxu0 0.0
    %560 = vmatpush2.msra.mxu0 0.0
    %561 = vmatprep.subr.mxu0 0.0
    %562 = vmatpush2.msra.mxu0 0.0
    %563 = vmatprep.subr.mxu0 0.0
    %564 = vmatpush2.msra.mxu0 0.0
    %565 = vmatprep.subr.mxu0 0.0
    %566 = vmatpush2.msra.mxu0 0.0
    %567 = vmatprep.subr.mxu0 0.0
    %568 = vmatpush2.msra.mxu0 0.0
    %569 = vmatprep.subr.mxu0 0.0
    %570 = vmatpush2.msra.mxu0 0.0
    %571 = vmatprep.subr.mxu0 0.0
    %572 = vmatpush2.msra.mxu0 0.0
    %573 = vmatprep.subr.mxu0 0.0
    %574 = vmatpush2.msra.mxu0 0.0
    %575 = vmatprep.subr.mxu0 0.0
    %576 = vmatpush2.msra.mxu0 0.0
    %577 = vmatprep.subr.mxu0 0.0
    %578 = vmatpush2.msra.mxu0 0.0
    %579 = vmatprep.subr.mxu0 0.0
    %580 = vmatpush2.msra.mxu0 0.0
    %581 = vmatprep.subr.mxu0 0.0
    %582 = vmatpush2.msra.mxu0 0.0
    %583 = vmatprep.mubr.f32.mxu0 0.0
    %584 = vmatmul.mubr.f32.gmra.mxu0 %v517
    %v585 = vpop.f32.mrf.mxu0
    %v586 = vadd.f32 0.0, %v585
    %v587 = vpop.f32.mrf.mxu0
    %588 = vdwg.mxu0
    %v589 = vadd.f32 %v516, %v586
    %v590 = vxor.u32 %v589, 2147483648
    %v591 = vmul.f32 %v590, 1.442695
    %v592 = vpow.pop %v591
    %v593 = vadd.f32 %v592, 1.0
    %v594 = vrcp.pop %v593
    %v595 = vmul.f32 1.0, %v594
    %v596 = vtanh.pop %v589
    %v597 = vmul.f32 %v595, %v504
    %599 = vrot.lane.b32.xlu0 %v596, 64
    %v600 = vpop.permute.xlu0 %599
    %v602 = vmul.f32 %v595, %v600
    %604 = vrot.lane.b32.xlu0 %v602, 32
    %v605 = vpop.permute.xlu0 %604
    %v607 = vadd.f32 %v597, %v605
    %v608 = vtanh.pop %v607
    %610 = vrot.lane.b32.xlu0 %v608, 64
    %v611 = vpop.permute.xlu0 %610
    %v613 = vmul.f32 %v595, %v611
    %615 = vrot.lane.b32.xlu0 %v613, 32
    %v616 = vpop.permute.xlu0 %615
    %618 = vst.msk [vmem:[#allocation3 + $0x3] sm:$0x1] %vm308, %v616
    %v619 = vld [vmem:[#allocation2 + $0x4] sm:$0x1]
    %v620 = vsel %vm197, %v616, 0
    %622 = vmatprep.subr.mxu0 0.0
    %623 = vmatpush1.msra.mxu0 0.0
    %624 = vmatprep.subr.mxu0 0.0
    %625 = vmatpush1.msra.mxu0 0.0
    %626 = vmatprep.subr.mxu0 0.0
    %627 = vmatpush1.msra.mxu0 0.0
    %628 = vmatprep.subr.mxu0 0.0
    %629 = vmatpush1.msra.mxu0 0.0
    %630 = vmatprep.subr.mxu0 0.0
    %631 = vmatpush1.msra.mxu0 0.0
    %632 = vmatprep.subr.mxu0 0.0
    %633 = vmatpush1.msra.mxu0 0.0
    %634 = vmatprep.subr.mxu0 0.0
    %635 = vmatpush1.msra.mxu0 0.0
    %636 = vmatprep.subr.mxu0 0.0
    %637 = vmatpush1.msra.mxu0 0.0
    %638 = vmatprep.subr.mxu0 0.0
    %639 = vmatpush1.msra.mxu0 0.0
    %640 = vmatprep.subr.mxu0 0.0
    %641 = vmatpush1.msra.mxu0 0.0
    %642 = vmatprep.subr.mxu0 0.0
    %643 = vmatpush1.msra.mxu0 0.0
    %644 = vmatprep.subr.mxu0 0.0
    %645 = vmatpush1.msra.mxu0 0.0
    %646 = vmatprep.subr.mxu0 0.0
    %647 = vmatpush1.msra.mxu0 %v193
    %648 = vmatprep.subr.mxu0 0.0
    %649 = vmatpush1.msra.mxu0 %v192
    %650 = vmatprep.subr.mxu0 0.0
    %651 = vmatpush1.msra.mxu0 %v191
    %652 = vmatprep.subr.mxu0 0.0
    %653 = vmatpush1.msra.mxu0 %v190
    %654 = vmatprep.subr.mxu0 0.0
    %655 = vmatpush2.msra.mxu0 0.0
    %656 = vmatprep.subr.mxu0 0.0
    %657 = vmatpush2.msra.mxu0 0.0
    %658 = vmatprep.subr.mxu0 0.0
    %659 = vmatpush2.msra.mxu0 0.0
    %660 = vmatprep.subr.mxu0 0.0
    %661 = vmatpush2.msra.mxu0 0.0
    %662 = vmatprep.subr.mxu0 0.0
    %663 = vmatpush2.msra.mxu0 0.0
    %664 = vmatprep.subr.mxu0 0.0
    %665 = vmatpush2.msra.mxu0 0.0
    %666 = vmatprep.subr.mxu0 0.0
    %667 = vmatpush2.msra.mxu0 0.0
    %668 = vmatprep.subr.mxu0 0.0
    %669 = vmatpush2.msra.mxu0 0.0
    %670 = vmatprep.subr.mxu0 0.0
    %671 = vmatpush2.msra.mxu0 0.0
    %672 = vmatprep.subr.mxu0 0.0
    %673 = vmatpush2.msra.mxu0 0.0
    %674 = vmatprep.subr.mxu0 0.0
    %675 = vmatpush2.msra.mxu0 0.0
    %676 = vmatprep.subr.mxu0 0.0
    %677 = vmatpush2.msra.mxu0 0.0
    %678 = vmatprep.subr.mxu0 0.0
    %679 = vmatpush2.msra.mxu0 0.0
    %680 = vmatprep.subr.mxu0 0.0
    %681 = vmatpush2.msra.mxu0 0.0
    %682 = vmatprep.subr.mxu0 0.0
    %683 = vmatpush2.msra.mxu0 0.0
    %684 = vmatprep.subr.mxu0 0.0
    %685 = vmatpush2.msra.mxu0 0.0
    %686 = vmatprep.mubr.f32.mxu0 0.0
    %687 = vmatmul.mubr.f32.gmra.mxu0 %v620
    %v688 = vpop.f32.mrf.mxu0
    %v689 = vadd.f32 0.0, %v688
    %v690 = vpop.f32.mrf.mxu0
    %691 = vdwg.mxu0
    %v692 = vadd.f32 %v619, %v689
    %v693 = vxor.u32 %v692, 2147483648
    %v694 = vmul.f32 %v693, 1.442695
    %v695 = vpow.pop %v694
    %v696 = vadd.f32 %v695, 1.0
    %v697 = vrcp.pop %v696
    %v698 = vmul.f32 1.0, %v697
    %v699 = vtanh.pop %v692
    %v700 = vmul.f32 %v698, %v607
    %702 = vrot.lane.b32.xlu0 %v699, 64
    %v703 = vpop.permute.xlu0 %702
    %v705 = vmul.f32 %v698, %v703
    %707 = vrot.lane.b32.xlu0 %v705, 32
    %v708 = vpop.permute.xlu0 %707
    %v710 = vadd.f32 %v700, %v708
    %v711 = vtanh.pop %v710
    %713 = vrot.lane.b32.xlu0 %v711, 64
    %v714 = vpop.permute.xlu0 %713
    %v716 = vmul.f32 %v698, %v714
    %718 = vrot.lane.b32.xlu0 %v716, 32
    %v719 = vpop.permute.xlu0 %718
    %721 = vst.msk [vmem:[#allocation3 + $0x4] sm:$0x1] %vm308, %v719
    %v722 = vld [vmem:[#allocation2 + $0x5] sm:$0x1]
    %v723 = vsel %vm197, %v719, 0
    %725 = vmatprep.subr.mxu0 0.0
    %726 = vmatpush1.msra.mxu0 0.0
    %727 = vmatprep.subr.mxu0 0.0
    %728 = vmatpush1.msra.mxu0 0.0
    %729 = vmatprep.subr.mxu0 0.0
    %730 = vmatpush1.msra.mxu0 0.0
    %731 = vmatprep.subr.mxu0 0.0
    %732 = vmatpush1.msra.mxu0 0.0
    %733 = vmatprep.subr.mxu0 0.0
    %734 = vmatpush1.msra.mxu0 0.0
    %735 = vmatprep.subr.mxu0 0.0
    %736 = vmatpush1.msra.mxu0 0.0
    %737 = vmatprep.subr.mxu0 0.0
    %738 = vmatpush1.msra.mxu0 0.0
    %739 = vmatprep.subr.mxu0 0.0
    %740 = vmatpush1.msra.mxu0 0.0
    %741 = vmatprep.subr.mxu0 0.0
    %742 = vmatpush1.msra.mxu0 0.0
    %743 = vmatprep.subr.mxu0 0.0
    %744 = vmatpush1.msra.mxu0 0.0
    %745 = vmatprep.subr.mxu0 0.0
    %746 = vmatpush1.msra.mxu0 0.0
    %747 = vmatprep.subr.mxu0 0.0
    %748 = vmatpush1.msra.mxu0 0.0
    %749 = vmatprep.subr.mxu0 0.0
    %750 = vmatpush1.msra.mxu0 %v193
    %751 = vmatprep.subr.mxu0 0.0
    %752 = vmatpush1.msra.mxu0 %v192
    %753 = vmatprep.subr.mxu0 0.0
    %754 = vmatpush1.msra.mxu0 %v191
    %755 = vmatprep.subr.mxu0 0.0
    %756 = vmatpush1.msra.mxu0 %v190
    %757 = vmatprep.subr.mxu0 0.0
    %758 = vmatpush2.msra.mxu0 0.0
    %759 = vmatprep.subr.mxu0 0.0
    %760 = vmatpush2.msra.mxu0 0.0
    %761 = vmatprep.subr.mxu0 0.0
    %762 = vmatpush2.msra.mxu0 0.0
    %763 = vmatprep.subr.mxu0 0.0
    %764 = vmatpush2.msra.mxu0 0.0
    %765 = vmatprep.subr.mxu0 0.0
    %766 = vmatpush2.msra.mxu0 0.0
    %767 = vmatprep.subr.mxu0 0.0
    %768 = vmatpush2.msra.mxu0 0.0
    %769 = vmatprep.subr.mxu0 0.0
    %770 = vmatpush2.msra.mxu0 0.0
    %771 = vmatprep.subr.mxu0 0.0
    %772 = vmatpush2.msra.mxu0 0.0
    %773 = vmatprep.subr.mxu0 0.0
    %774 = vmatpush2.msra.mxu0 0.0
    %775 = vmatprep.subr.mxu0 0.0
    %776 = vmatpush2.msra.mxu0 0.0
    %777 = vmatprep.subr.mxu0 0.0
    %778 = vmatpush2.msra.mxu0 0.0
    %779 = vmatprep.subr.mxu0 0.0
    %780 = vmatpush2.msra.mxu0 0.0
    %781 = vmatprep.subr.mxu0 0.0
    %782 = vmatpush2.msra.mxu0 0.0
    %783 = vmatprep.subr.mxu0 0.0
    %784 = vmatpush2.msra.mxu0 0.0
    %785 = vmatprep.subr.mxu0 0.0
    %786 = vmatpush2.msra.mxu0 0.0
    %787 = vmatprep.subr.mxu0 0.0
    %788 = vmatpush2.msra.mxu0 0.0
    %789 = vmatprep.mubr.f32.mxu0 0.0
    %790 = vmatmul.mubr.f32.gmra.mxu0 %v723
    %v791 = vpop.f32.mrf.mxu0
    %v792 = vadd.f32 0.0, %v791
    %v793 = vpop.f32.mrf.mxu0
    %794 = vdwg.mxu0
    %v795 = vadd.f32 %v722, %v792
    %v796 = vxor.u32 %v795, 2147483648
    %v797 = vmul.f32 %v796, 1.442695
    %v798 = vpow.pop %v797
    %v799 = vadd.f32 %v798, 1.0
    %v800 = vrcp.pop %v799
    %v801 = vmul.f32 1.0, %v800
    %v802 = vtanh.pop %v795
    %v803 = vmul.f32 %v801, %v710
    %805 = vrot.lane.b32.xlu0 %v802, 64
    %v806 = vpop.permute.xlu0 %805
    %v808 = vmul.f32 %v801, %v806
    %810 = vrot.lane.b32.xlu0 %v808, 32
    %v811 = vpop.permute.xlu0 %810
    %v813 = vadd.f32 %v803, %v811
    %v814 = vtanh.pop %v813
    %816 = vrot.lane.b32.xlu0 %v814, 64
    %v817 = vpop.permute.xlu0 %816
    %v819 = vmul.f32 %v801, %v817
    %821 = vrot.lane.b32.xlu0 %v819, 32
    %v822 = vpop.permute.xlu0 %821
    %824 = vst.msk [vmem:[#allocation3 + $0x5] sm:$0x1] %vm308, %v822
    %v825 = vld [vmem:[#allocation2 + $0x6] sm:$0x1]
    %v826 = vsel %vm197, %v822, 0
    %828 = vmatprep.subr.mxu0 0.0
    %829 = vmatpush1.msra.mxu0 0.0
    %830 = vmatprep.subr.mxu0 0.0
    %831 = vmatpush1.msra.mxu0 0.0
    %832 = vmatprep.subr.mxu0 0.0
    %833 = vmatpush1.msra.mxu0 0.0
    %834 = vmatprep.subr.mxu0 0.0
    %835 = vmatpush1.msra.mxu0 0.0
    %836 = vmatprep.subr.mxu0 0.0
    %837 = vmatpush1.msra.mxu0 0.0
    %838 = vmatprep.subr.mxu0 0.0
    %839 = vmatpush1.msra.mxu0 0.0
    %840 = vmatprep.subr.mxu0 0.0
    %841 = vmatpush1.msra.mxu0 0.0
    %842 = vmatprep.subr.mxu0 0.0
    %843 = vmatpush1.msra.mxu0 0.0
    %844 = vmatprep.subr.mxu0 0.0
    %845 = vmatpush1.msra.mxu0 0.0
    %846 = vmatprep.subr.mxu0 0.0
    %847 = vmatpush1.msra.mxu0 0.0
    %848 = vmatprep.subr.mxu0 0.0
    %849 = vmatpush1.msra.mxu0 0.0
    %850 = vmatprep.subr.mxu0 0.0
    %851 = vmatpush1.msra.mxu0 0.0
    %852 = vmatprep.subr.mxu0 0.0
    %853 = vmatpush1.msra.mxu0 %v193
    %854 = vmatprep.subr.mxu0 0.0
    %855 = vmatpush1.msra.mxu0 %v192
    %856 = vmatprep.subr.mxu0 0.0
    %857 = vmatpush1.msra.mxu0 %v191
    %858 = vmatprep.subr.mxu0 0.0
    %859 = vmatpush1.msra.mxu0 %v190
    %860 = vmatprep.subr.mxu0 0.0
    %861 = vmatpush2.msra.mxu0 0.0
    %862 = vmatprep.subr.mxu0 0.0
    %863 = vmatpush2.msra.mxu0 0.0
    %864 = vmatprep.subr.mxu0 0.0
    %865 = vmatpush2.msra.mxu0 0.0
    %866 = vmatprep.subr.mxu0 0.0
    %867 = vmatpush2.msra.mxu0 0.0
    %868 = vmatprep.subr.mxu0 0.0
    %869 = vmatpush2.msra.mxu0 0.0
    %870 = vmatprep.subr.mxu0 0.0
    %871 = vmatpush2.msra.mxu0 0.0
    %872 = vmatprep.subr.mxu0 0.0
    %873 = vmatpush2.msra.mxu0 0.0
    %874 = vmatprep.subr.mxu0 0.0
    %875 = vmatpush2.msra.mxu0 0.0
    %876 = vmatprep.subr.mxu0 0.0
    %877 = vmatpush2.msra.mxu0 0.0
    %878 = vmatprep.subr.mxu0 0.0
    %879 = vmatpush2.msra.mxu0 0.0
    %880 = vmatprep.subr.mxu0 0.0
    %881 = vmatpush2.msra.mxu0 0.0
    %882 = vmatprep.subr.mxu0 0.0
    %883 = vmatpush2.msra.mxu0 0.0
    %884 = vmatprep.subr.mxu0 0.0
    %885 = vmatpush2.msra.mxu0 0.0
    %886 = vmatprep.subr.mxu0 0.0
    %887 = vmatpush2.msra.mxu0 0.0
    %888 = vmatprep.subr.mxu0 0.0
    %889 = vmatpush2.msra.mxu0 0.0
    %890 = vmatprep.subr.mxu0 0.0
    %891 = vmatpush2.msra.mxu0 0.0
    %892 = vmatprep.mubr.f32.mxu0 0.0
    %893 = vmatmul.mubr.f32.gmra.mxu0 %v826
    %v894 = vpop.f32.mrf.mxu0
    %v895 = vadd.f32 0.0, %v894
    %v896 = vpop.f32.mrf.mxu0
    %897 = vdwg.mxu0
    %v898 = vadd.f32 %v825, %v895
    %v899 = vxor.u32 %v898, 2147483648
    %v900 = vmul.f32 %v899, 1.442695
    %v901 = vpow.pop %v900
    %v902 = vadd.f32 %v901, 1.0
    %v903 = vrcp.pop %v902
    %v904 = vmul.f32 1.0, %v903
    %v905 = vtanh.pop %v898
    %v906 = vmul.f32 %v904, %v813
    %908 = vrot.lane.b32.xlu0 %v905, 64
    %v909 = vpop.permute.xlu0 %908
    %v911 = vmul.f32 %v904, %v909
    %913 = vrot.lane.b32.xlu0 %v911, 32
    %v914 = vpop.permute.xlu0 %913
    %v916 = vadd.f32 %v906, %v914
    %v917 = vtanh.pop %v916
    %919 = vrot.lane.b32.xlu0 %v917, 64
    %v920 = vpop.permute.xlu0 %919
    %v922 = vmul.f32 %v904, %v920
    %924 = vrot.lane.b32.xlu0 %v922, 32
    %v925 = vpop.permute.xlu0 %924
    %927 = vst.msk [vmem:[#allocation3 + $0x6] sm:$0x1] %vm308, %v925
    %v928 = vld [vmem:[#allocation2 + $0x7] sm:$0x1]
    %v929 = vsel %vm197, %v925, 0
    %931 = vmatprep.subr.mxu0 0.0
    %932 = vmatpush1.msra.mxu0 0.0
    %933 = vmatprep.subr.mxu0 0.0
    %934 = vmatpush1.msra.mxu0 0.0
    %935 = vmatprep.subr.mxu0 0.0
    %936 = vmatpush1.msra.mxu0 0.0
    %937 = vmatprep.subr.mxu0 0.0
    %938 = vmatpush1.msra.mxu0 0.0
    %939 = vmatprep.subr.mxu0 0.0
    %940 = vmatpush1.msra.mxu0 0.0
    %941 = vmatprep.subr.mxu0 0.0
    %942 = vmatpush1.msra.mxu0 0.0
    %943 = vmatprep.subr.mxu0 0.0
    %944 = vmatpush1.msra.mxu0 0.0
    %945 = vmatprep.subr.mxu0 0.0
    %946 = vmatpush1.msra.mxu0 0.0
    %947 = vmatprep.subr.mxu0 0.0
    %948 = vmatpush1.msra.mxu0 0.0
    %949 = vmatprep.subr.mxu0 0.0
    %950 = vmatpush1.msra.mxu0 0.0
    %951 = vmatprep.subr.mxu0 0.0
    %952 = vmatpush1.msra.mxu0 0.0
    %953 = vmatprep.subr.mxu0 0.0
    %954 = vmatpush1.msra.mxu0 0.0
    %955 = vmatprep.subr.mxu0 0.0
    %956 = vmatpush1.msra.mxu0 %v193
    %957 = vmatprep.subr.mxu0 0.0
    %958 = vmatpush1.msra.mxu0 %v192
    %959 = vmatprep.subr.mxu0 0.0
    %960 = vmatpush1.msra.mxu0 %v191
    %961 = vmatprep.subr.mxu0 0.0
    %962 = vmatpush1.msra.mxu0 %v190
    %963 = vmatprep.subr.mxu0 0.0
    %964 = vmatpush2.msra.mxu0 0.0
    %965 = vmatprep.subr.mxu0 0.0
    %966 = vmatpush2.msra.mxu0 0.0
    %967 = vmatprep.subr.mxu0 0.0
    %968 = vmatpush2.msra.mxu0 0.0
    %969 = vmatprep.subr.mxu0 0.0
    %970 = vmatpush2.msra.mxu0 0.0
    %971 = vmatprep.subr.mxu0 0.0
    %972 = vmatpush2.msra.mxu0 0.0
    %973 = vmatprep.subr.mxu0 0.0
    %974 = vmatpush2.msra.mxu0 0.0
    %975 = vmatprep.subr.mxu0 0.0
    %976 = vmatpush2.msra.mxu0 0.0
    %977 = vmatprep.subr.mxu0 0.0
    %978 = vmatpush2.msra.mxu0 0.0
    %979 = vmatprep.subr.mxu0 0.0
    %980 = vmatpush2.msra.mxu0 0.0
    %981 = vmatprep.subr.mxu0 0.0
    %982 = vmatpush2.msra.mxu0 0.0
    %983 = vmatprep.subr.mxu0 0.0
    %984 = vmatpush2.msra.mxu0 0.0
    %985 = vmatprep.subr.mxu0 0.0
    %986 = vmatpush2.msra.mxu0 0.0
    %987 = vmatprep.subr.mxu0 0.0
    %988 = vmatpush2.msra.mxu0 0.0
    %989 = vmatprep.subr.mxu0 0.0
    %990 = vmatpush2.msra.mxu0 0.0
    %991 = vmatprep.subr.mxu0 0.0
    %992 = vmatpush2.msra.mxu0 0.0
    %993 = vmatprep.subr.mxu0 0.0
    %994 = vmatpush2.msra.mxu0 0.0
    %995 = vmatprep.mubr.f32.mxu0 0.0
    %996 = vmatmul.mubr.f32.gmra.mxu0 %v929
    %v997 = vpop.f32.mrf.mxu0
    %v998 = vadd.f32 0.0, %v997
    %v999 = vpop.f32.mrf.mxu0
    %1000 = vdwg.mxu0
    %v1001 = vadd.f32 %v928, %v998
    %v1002 = vxor.u32 %v1001, 2147483648
    %v1003 = vmul.f32 %v1002, 1.442695
    %v1004 = vpow.pop %v1003
    %v1005 = vadd.f32 %v1004, 1.0
    %v1006 = vrcp.pop %v1005
    %v1007 = vmul.f32 1.0, %v1006
    %v1008 = vtanh.pop %v1001
    %v1009 = vmul.f32 %v1007, %v916
    %1011 = vrot.lane.b32.xlu0 %v1008, 64
    %v1012 = vpop.permute.xlu0 %1011
    %v1014 = vmul.f32 %v1007, %v1012
    %1016 = vrot.lane.b32.xlu0 %v1014, 32
    %v1017 = vpop.permute.xlu0 %1016
    %v1019 = vadd.f32 %v1009, %v1017
    %v1020 = vtanh.pop %v1019
    %1022 = vrot.lane.b32.xlu0 %v1020, 64
    %v1023 = vpop.permute.xlu0 %1022
    %v1025 = vmul.f32 %v1007, %v1023
    %1027 = vrot.lane.b32.xlu0 %v1025, 32
    %v1028 = vpop.permute.xlu0 %1027
    %1030 = vst.msk [vmem:[#allocation3 + $0x7] sm:$0x1] %vm308, %v1028
    %1031 = vst.msk [vmem:[#allocation14] sm:$0x1] %vm308, %v1028
    %1033 = vrot.lane.b32.xlu0 %v1019, 96
    %v1034 = vpop.permute.xlu0 %1033
    %1036 = vst.msk [vmem:[#allocation16] sm:$0x1] %vm308, %v1034
    %v1037 = vld [vmem:[#allocation3] sm:$0xff]
    %v1038 = vld [vmem:[%s4] sm:$0xff]
    %v1039 = vld [vmem:[%s4 + $0x8] sm:$0xff]
    %v1040 = vld [vmem:[%s4 + $0x10] sm:$0xff]
    %v1041 = vld [vmem:[%s4 + $0x18] sm:$0xff]
    %v1042 = vld [vmem:[#allocation10] sm:$0x1]
    %v1044 = vlaneseq
    %v1045 = vshrl.u32 %v1044, 7
    %v1046 = vsub.s32 0, %v1045
    %v1047 = vrot.slane %v1042, %v1046
    %v1050 = vsel %vm197, %v1037, 0
    %1052 = vmatprep.subr.mxu0 0.0
    %1053 = vmatpush1.msra.mxu0 0.0
    %1054 = vmatprep.subr.mxu0 0.0
    %1055 = vmatpush1.msra.mxu0 0.0
    %1056 = vmatprep.subr.mxu0 0.0
    %1057 = vmatpush1.msra.mxu0 0.0
    %1058 = vmatprep.subr.mxu0 0.0
    %1059 = vmatpush1.msra.mxu0 0.0
    %1060 = vmatprep.subr.mxu0 0.0
    %1061 = vmatpush1.msra.mxu0 0.0
    %1062 = vmatprep.subr.mxu0 0.0
    %1063 = vmatpush1.msra.mxu0 0.0
    %1064 = vmatprep.subr.mxu0 0.0
    %1065 = vmatpush1.msra.mxu0 0.0
    %1066 = vmatprep.subr.mxu0 0.0
    %1067 = vmatpush1.msra.mxu0 0.0
    %1068 = vmatprep.subr.mxu0 0.0
    %1069 = vmatpush1.msra.mxu0 0.0
    %1070 = vmatprep.subr.mxu0 0.0
    %1071 = vmatpush1.msra.mxu0 0.0
    %1072 = vmatprep.subr.mxu0 0.0
    %1073 = vmatpush1.msra.mxu0 0.0
    %1074 = vmatprep.subr.mxu0 0.0
    %1075 = vmatpush1.msra.mxu0 0.0
    %1076 = vmatprep.subr.mxu0 0.0
    %1077 = vmatpush1.msra.mxu0 %v1041
    %1078 = vmatprep.subr.mxu0 0.0
    %1079 = vmatpush1.msra.mxu0 %v1040
    %1080 = vmatprep.subr.mxu0 0.0
    %1081 = vmatpush1.msra.mxu0 %v1039
    %1082 = vmatprep.subr.mxu0 0.0
    %1083 = vmatpush1.msra.mxu0 %v1038
    %1084 = vmatprep.subr.mxu0 0.0
    %1085 = vmatpush2.msra.mxu0 0.0
    %1086 = vmatprep.subr.mxu0 0.0
    %1087 = vmatpush2.msra.mxu0 0.0
    %1088 = vmatprep.subr.mxu0 0.0
    %1089 = vmatpush2.msra.mxu0 0.0
    %1090 = vmatprep.subr.mxu0 0.0
    %1091 = vmatpush2.msra.mxu0 0.0
    %1092 = vmatprep.subr.mxu0 0.0
    %1093 = vmatpush2.msra.mxu0 0.0
    %1094 = vmatprep.subr.mxu0 0.0
    %1095 = vmatpush2.msra.mxu0 0.0
    %1096 = vmatprep.subr.mxu0 0.0
    %1097 = vmatpush2.msra.mxu0 0.0
    %1098 = vmatprep.subr.mxu0 0.0
    %1099 = vmatpush2.msra.mxu0 0.0
    %1100 = vmatprep.subr.mxu0 0.0
    %1101 = vmatpush2.msra.mxu0 0.0
    %1102 = vmatprep.subr.mxu0 0.0
    %1103 = vmatpush2.msra.mxu0 0.0
    %1104 = vmatprep.subr.mxu0 0.0
    %1105 = vmatpush2.msra.mxu0 0.0
    %1106 = vmatprep.subr.mxu0 0.0
    %1107 = vmatpush2.msra.mxu0 0.0
    %1108 = vmatprep.subr.mxu0 0.0
    %1109 = vmatpush2.msra.mxu0 0.0
    %1110 = vmatprep.subr.mxu0 0.0
    %1111 = vmatpush2.msra.mxu0 0.0
    %1112 = vmatprep.subr.mxu0 0.0
    %1113 = vmatpush2.msra.mxu0 0.0
    %1114 = vmatprep.subr.mxu0 0.0
    %1115 = vmatpush2.msra.mxu0 0.0
    %1116 = vmatprep.mubr.f32.mxu0 0.0
    %1117 = vmatmul.mubr.f32.gmra.mxu0 %v1050
    %v1118 = vpop.f32.mrf.mxu0
    %v1119 = vadd.f32 %v1047, %v1118
    %v1120 = vpop.f32.mrf.mxu0
    %1121 = vdwg.mxu0
    %1122 = vst [vmem:[#allocation2] sm:$0xff] %v1119
    %v1123 = vld [vmem:[#allocation9] sm:$0xff]
    %v1124 = vld [vmem:[#allocation9 + $0x8] sm:$0xff]
    %v1125 = vld [vmem:[#allocation9 + $0x10] sm:$0xff]
    %v1126 = vld [vmem:[#allocation9 + $0x18] sm:$0xff]
    %s1127 = scalar_lea.vmem %s9, 1
    %v1128 = vld [vmem:[%s1127] sm:$0x1]
    %s1129 = scalar_lea.vmem %s10, 1
    %v1130 = vld [vmem:[%s1129] sm:$0x1]
    %v1131 = vld [vmem:[#allocation2] sm:$0x1]
    %v1133 = vsel %vm197, %v1128, 0
    %1135 = vmatprep.subr.mxu0 0.0
    %1136 = vmatpush1.msra.mxu0 0.0
    %1137 = vmatprep.subr.mxu0 0.0
    %1138 = vmatpush1.msra.mxu0 0.0
    %1139 = vmatprep.subr.mxu0 0.0
    %1140 = vmatpush1.msra.mxu0 0.0
    %1141 = vmatprep.subr.mxu0 0.0
    %1142 = vmatpush1.msra.mxu0 0.0
    %1143 = vmatprep.subr.mxu0 0.0
    %1144 = vmatpush1.msra.mxu0 0.0
    %1145 = vmatprep.subr.mxu0 0.0
    %1146 = vmatpush1.msra.mxu0 0.0
    %1147 = vmatprep.subr.mxu0 0.0
    %1148 = vmatpush1.msra.mxu0 0.0
    %1149 = vmatprep.subr.mxu0 0.0
    %1150 = vmatpush1.msra.mxu0 0.0
    %1151 = vmatprep.subr.mxu0 0.0
    %1152 = vmatpush1.msra.mxu0 0.0
    %1153 = vmatprep.subr.mxu0 0.0
    %1154 = vmatpush1.msra.mxu0 0.0
    %1155 = vmatprep.subr.mxu0 0.0
    %1156 = vmatpush1.msra.mxu0 0.0
    %1157 = vmatprep.subr.mxu0 0.0
    %1158 = vmatpush1.msra.mxu0 0.0
    %1159 = vmatprep.subr.mxu0 0.0
    %1160 = vmatpush1.msra.mxu0 %v1126
    %1161 = vmatprep.subr.mxu0 0.0
    %1162 = vmatpush1.msra.mxu0 %v1125
    %1163 = vmatprep.subr.mxu0 0.0
    %1164 = vmatpush1.msra.mxu0 %v1124
    %1165 = vmatprep.subr.mxu0 0.0
    %1166 = vmatpush1.msra.mxu0 %v1123
    %1167 = vmatprep.subr.mxu0 0.0
    %1168 = vmatpush2.msra.mxu0 0.0
    %1169 = vmatprep.subr.mxu0 0.0
    %1170 = vmatpush2.msra.mxu0 0.0
    %1171 = vmatprep.subr.mxu0 0.0
    %1172 = vmatpush2.msra.mxu0 0.0
    %1173 = vmatprep.subr.mxu0 0.0
    %1174 = vmatpush2.msra.mxu0 0.0
    %1175 = vmatprep.subr.mxu0 0.0
    %1176 = vmatpush2.msra.mxu0 0.0
    %1177 = vmatprep.subr.mxu0 0.0
    %1178 = vmatpush2.msra.mxu0 0.0
    %1179 = vmatprep.subr.mxu0 0.0
    %1180 = vmatpush2.msra.mxu0 0.0
    %1181 = vmatprep.subr.mxu0 0.0
    %1182 = vmatpush2.msra.mxu0 0.0
    %1183 = vmatprep.subr.mxu0 0.0
    %1184 = vmatpush2.msra.mxu0 0.0
    %1185 = vmatprep.subr.mxu0 0.0
    %1186 = vmatpush2.msra.mxu0 0.0
    %1187 = vmatprep.subr.mxu0 0.0
    %1188 = vmatpush2.msra.mxu0 0.0
    %1189 = vmatprep.subr.mxu0 0.0
    %1190 = vmatpush2.msra.mxu0 0.0
    %1191 = vmatprep.subr.mxu0 0.0
    %1192 = vmatpush2.msra.mxu0 0.0
    %1193 = vmatprep.subr.mxu0 0.0
    %1194 = vmatpush2.msra.mxu0 0.0
    %1195 = vmatprep.subr.mxu0 0.0
    %1196 = vmatpush2.msra.mxu0 0.0
    %1197 = vmatprep.subr.mxu0 0.0
    %1198 = vmatpush2.msra.mxu0 0.0
    %1199 = vmatprep.mubr.f32.mxu0 0.0
    %1200 = vmatmul.mubr.f32.gmra.mxu0 %v1133
    %v1201 = vpop.f32.mrf.mxu0
    %v1202 = vadd.f32 0.0, %v1201
    %v1203 = vpop.f32.mrf.mxu0
    %1204 = vdwg.mxu0
    %v1205 = vadd.f32 %v1131, %v1202
    %v1206 = vxor.u32 %v1205, 2147483648
    %v1207 = vmul.f32 %v1206, 1.442695
    %v1208 = vpow.pop %v1207
    %v1209 = vadd.f32 %v1208, 1.0
    %v1210 = vrcp.pop %v1209
    %v1211 = vmul.f32 1.0, %v1210
    %v1212 = vtanh.pop %v1205
    %v1214 = vlaneseq
    %v1215 = vshrl.u32 %v1214, 7
    %v1216 = vsub.s32 0, %v1215
    %v1217 = vrot.slane %v1130, %v1216
    %1218 = vrot.lane.b32.xlu0 %v1217, 32
    %v1219 = vpop.permute.xlu0 %1218
    %v1221 = vmul.f32 %v1211, %v1219
    %1223 = vrot.lane.b32.xlu0 %v1212, 64
    %v1224 = vpop.permute.xlu0 %1223
    %v1226 = vmul.f32 %v1211, %v1224
    %1228 = vrot.lane.b32.xlu0 %v1226, 32
    %v1229 = vpop.permute.xlu0 %1228
    %v1231 = vadd.f32 %v1221, %v1229
    %v1232 = vtanh.pop %v1231
    %1234 = vrot.lane.b32.xlu0 %v1232, 64
    %v1235 = vpop.permute.xlu0 %1234
    %v1237 = vmul.f32 %v1211, %v1235
    %1239 = vrot.lane.b32.xlu0 %v1237, 32
    %v1240 = vpop.permute.xlu0 %1239
    %1242 = vst.msk [vmem:[#allocation3] sm:$0x1] %vm308, %v1240
    %v1243 = vld [vmem:[#allocation2 + $0x1] sm:$0x1]
    %v1244 = vsel %vm197, %v1240, 0
    %1246 = vmatprep.subr.mxu0 0.0
    %1247 = vmatpush1.msra.mxu0 0.0
    %1248 = vmatprep.subr.mxu0 0.0
    %1249 = vmatpush1.msra.mxu0 0.0
    %1250 = vmatprep.subr.mxu0 0.0
    %1251 = vmatpush1.msra.mxu0 0.0
    %1252 = vmatprep.subr.mxu0 0.0
    %1253 = vmatpush1.msra.mxu0 0.0
    %1254 = vmatprep.subr.mxu0 0.0
    %1255 = vmatpush1.msra.mxu0 0.0
    %1256 = vmatprep.subr.mxu0 0.0
    %1257 = vmatpush1.msra.mxu0 0.0
    %1258 = vmatprep.subr.mxu0 0.0
    %1259 = vmatpush1.msra.mxu0 0.0
    %1260 = vmatprep.subr.mxu0 0.0
    %1261 = vmatpush1.msra.mxu0 0.0
    %1262 = vmatprep.subr.mxu0 0.0
    %1263 = vmatpush1.msra.mxu0 0.0
    %1264 = vmatprep.subr.mxu0 0.0
    %1265 = vmatpush1.msra.mxu0 0.0
    %1266 = vmatprep.subr.mxu0 0.0
    %1267 = vmatpush1.msra.mxu0 0.0
    %1268 = vmatprep.subr.mxu0 0.0
    %1269 = vmatpush1.msra.mxu0 0.0
    %1270 = vmatprep.subr.mxu0 0.0
    %1271 = vmatpush1.msra.mxu0 %v1126
    %1272 = vmatprep.subr.mxu0 0.0
    %1273 = vmatpush1.msra.mxu0 %v1125
    %1274 = vmatprep.subr.mxu0 0.0
    %1275 = vmatpush1.msra.mxu0 %v1124
    %1276 = vmatprep.subr.mxu0 0.0
    %1277 = vmatpush1.msra.mxu0 %v1123
    %1278 = vmatprep.subr.mxu0 0.0
    %1279 = vmatpush2.msra.mxu0 0.0
    %1280 = vmatprep.subr.mxu0 0.0
    %1281 = vmatpush2.msra.mxu0 0.0
    %1282 = vmatprep.subr.mxu0 0.0
    %1283 = vmatpush2.msra.mxu0 0.0
    %1284 = vmatprep.subr.mxu0 0.0
    %1285 = vmatpush2.msra.mxu0 0.0
    %1286 = vmatprep.subr.mxu0 0.0
    %1287 = vmatpush2.msra.mxu0 0.0
    %1288 = vmatprep.subr.mxu0 0.0
    %1289 = vmatpush2.msra.mxu0 0.0
    %1290 = vmatprep.subr.mxu0 0.0
    %1291 = vmatpush2.msra.mxu0 0.0
    %1292 = vmatprep.subr.mxu0 0.0
    %1293 = vmatpush2.msra.mxu0 0.0
    %1294 = vmatprep.subr.mxu0 0.0
    %1295 = vmatpush2.msra.mxu0 0.0
    %1296 = vmatprep.subr.mxu0 0.0
    %1297 = vmatpush2.msra.mxu0 0.0
    %1298 = vmatprep.subr.mxu0 0.0
    %1299 = vmatpush2.msra.mxu0 0.0
    %1300 = vmatprep.subr.mxu0 0.0
    %1301 = vmatpush2.msra.mxu0 0.0
    %1302 = vmatprep.subr.mxu0 0.0
    %1303 = vmatpush2.msra.mxu0 0.0
    %1304 = vmatprep.subr.mxu0 0.0
    %1305 = vmatpush2.msra.mxu0 0.0
    %1306 = vmatprep.subr.mxu0 0.0
    %1307 = vmatpush2.msra.mxu0 0.0
    %1308 = vmatprep.subr.mxu0 0.0
    %1309 = vmatpush2.msra.mxu0 0.0
    %1310 = vmatprep.mubr.f32.mxu0 0.0
    %1311 = vmatmul.mubr.f32.gmra.mxu0 %v1244
    %v1312 = vpop.f32.mrf.mxu0
    %v1313 = vadd.f32 0.0, %v1312
    %v1314 = vpop.f32.mrf.mxu0
    %1315 = vdwg.mxu0
    %v1316 = vadd.f32 %v1243, %v1313
    %v1317 = vxor.u32 %v1316, 2147483648
    %v1318 = vmul.f32 %v1317, 1.442695
    %v1319 = vpow.pop %v1318
    %v1320 = vadd.f32 %v1319, 1.0
    %v1321 = vrcp.pop %v1320
    %v1322 = vmul.f32 1.0, %v1321
    %v1323 = vtanh.pop %v1316
    %v1324 = vmul.f32 %v1322, %v1231
    %1326 = vrot.lane.b32.xlu0 %v1323, 64
    %v1327 = vpop.permute.xlu0 %1326
    %v1329 = vmul.f32 %v1322, %v1327
    %1331 = vrot.lane.b32.xlu0 %v1329, 32
    %v1332 = vpop.permute.xlu0 %1331
    %v1334 = vadd.f32 %v1324, %v1332
    %v1335 = vtanh.pop %v1334
    %1337 = vrot.lane.b32.xlu0 %v1335, 64
    %v1338 = vpop.permute.xlu0 %1337
    %v1340 = vmul.f32 %v1322, %v1338
    %1342 = vrot.lane.b32.xlu0 %v1340, 32
    %v1343 = vpop.permute.xlu0 %1342
    %1345 = vst.msk [vmem:[#allocation3 + $0x1] sm:$0x1] %vm308, %v1343
    %v1346 = vld [vmem:[#allocation2 + $0x2] sm:$0x1]
    %v1347 = vsel %vm197, %v1343, 0
    %1349 = vmatprep.subr.mxu0 0.0
    %1350 = vmatpush1.msra.mxu0 0.0
    %1351 = vmatprep.subr.mxu0 0.0
    %1352 = vmatpush1.msra.mxu0 0.0
    %1353 = vmatprep.subr.mxu0 0.0
    %1354 = vmatpush1.msra.mxu0 0.0
    %1355 = vmatprep.subr.mxu0 0.0
    %1356 = vmatpush1.msra.mxu0 0.0
    %1357 = vmatprep.subr.mxu0 0.0
    %1358 = vmatpush1.msra.mxu0 0.0
    %1359 = vmatprep.subr.mxu0 0.0
    %1360 = vmatpush1.msra.mxu0 0.0
    %1361 = vmatprep.subr.mxu0 0.0
    %1362 = vmatpush1.msra.mxu0 0.0
    %1363 = vmatprep.subr.mxu0 0.0
    %1364 = vmatpush1.msra.mxu0 0.0
    %1365 = vmatprep.subr.mxu0 0.0
    %1366 = vmatpush1.msra.mxu0 0.0
    %1367 = vmatprep.subr.mxu0 0.0
    %1368 = vmatpush1.msra.mxu0 0.0
    %1369 = vmatprep.subr.mxu0 0.0
    %1370 = vmatpush1.msra.mxu0 0.0
    %1371 = vmatprep.subr.mxu0 0.0
    %1372 = vmatpush1.msra.mxu0 0.0
    %1373 = vmatprep.subr.mxu0 0.0
    %1374 = vmatpush1.msra.mxu0 %v1126
    %1375 = vmatprep.subr.mxu0 0.0
    %1376 = vmatpush1.msra.mxu0 %v1125
    %1377 = vmatprep.subr.mxu0 0.0
    %1378 = vmatpush1.msra.mxu0 %v1124
    %1379 = vmatprep.subr.mxu0 0.0
    %1380 = vmatpush1.msra.mxu0 %v1123
    %1381 = vmatprep.subr.mxu0 0.0
    %1382 = vmatpush2.msra.mxu0 0.0
    %1383 = vmatprep.subr.mxu0 0.0
    %1384 = vmatpush2.msra.mxu0 0.0
    %1385 = vmatprep.subr.mxu0 0.0
    %1386 = vmatpush2.msra.mxu0 0.0
    %1387 = vmatprep.subr.mxu0 0.0
    %1388 = vmatpush2.msra.mxu0 0.0
    %1389 = vmatprep.subr.mxu0 0.0
    %1390 = vmatpush2.msra.mxu0 0.0
    %1391 = vmatprep.subr.mxu0 0.0
    %1392 = vmatpush2.msra.mxu0 0.0
    %1393 = vmatprep.subr.mxu0 0.0
    %1394 = vmatpush2.msra.mxu0 0.0
    %1395 = vmatprep.subr.mxu0 0.0
    %1396 = vmatpush2.msra.mxu0 0.0
    %1397 = vmatprep.subr.mxu0 0.0
    %1398 = vmatpush2.msra.mxu0 0.0
    %1399 = vmatprep.subr.mxu0 0.0
    %1400 = vmatpush2.msra.mxu0 0.0
    %1401 = vmatprep.subr.mxu0 0.0
    %1402 = vmatpush2.msra.mxu0 0.0
    %1403 = vmatprep.subr.mxu0 0.0
    %1404 = vmatpush2.msra.mxu0 0.0
    %1405 = vmatprep.subr.mxu0 0.0
    %1406 = vmatpush2.msra.mxu0 0.0
    %1407 = vmatprep.subr.mxu0 0.0
    %1408 = vmatpush2.msra.mxu0 0.0
    %1409 = vmatprep.subr.mxu0 0.0
    %1410 = vmatpush2.msra.mxu0 0.0
    %1411 = vmatprep.subr.mxu0 0.0
    %1412 = vmatpush2.msra.mxu0 0.0
    %1413 = vmatprep.mubr.f32.mxu0 0.0
    %1414 = vmatmul.mubr.f32.gmra.mxu0 %v1347
    %v1415 = vpop.f32.mrf.mxu0
    %v1416 = vadd.f32 0.0, %v1415
    %v1417 = vpop.f32.mrf.mxu0
    %1418 = vdwg.mxu0
    %v1419 = vadd.f32 %v1346, %v1416
    %v1420 = vxor.u32 %v1419, 2147483648
    %v1421 = vmul.f32 %v1420, 1.442695
    %v1422 = vpow.pop %v1421
    %v1423 = vadd.f32 %v1422, 1.0
    %v1424 = vrcp.pop %v1423
    %v1425 = vmul.f32 1.0, %v1424
    %v1426 = vtanh.pop %v1419
    %v1427 = vmul.f32 %v1425, %v1334
    %1429 = vrot.lane.b32.xlu0 %v1426, 64
    %v1430 = vpop.permute.xlu0 %1429
    %v1432 = vmul.f32 %v1425, %v1430
    %1434 = vrot.lane.b32.xlu0 %v1432, 32
    %v1435 = vpop.permute.xlu0 %1434
    %v1437 = vadd.f32 %v1427, %v1435
    %v1438 = vtanh.pop %v1437
    %1440 = vrot.lane.b32.xlu0 %v1438, 64
    %v1441 = vpop.permute.xlu0 %1440
    %v1443 = vmul.f32 %v1425, %v1441
    %1445 = vrot.lane.b32.xlu0 %v1443, 32
    %v1446 = vpop.permute.xlu0 %1445
    %1448 = vst.msk [vmem:[#allocation3 + $0x2] sm:$0x1] %vm308, %v1446
    %v1449 = vld [vmem:[#allocation2 + $0x3] sm:$0x1]
    %v1450 = vsel %vm197, %v1446, 0
    %1452 = vmatprep.subr.mxu0 0.0
    %1453 = vmatpush1.msra.mxu0 0.0
    %1454 = vmatprep.subr.mxu0 0.0
    %1455 = vmatpush1.msra.mxu0 0.0
    %1456 = vmatprep.subr.mxu0 0.0
    %1457 = vmatpush1.msra.mxu0 0.0
    %1458 = vmatprep.subr.mxu0 0.0
    %1459 = vmatpush1.msra.mxu0 0.0
    %1460 = vmatprep.subr.mxu0 0.0
    %1461 = vmatpush1.msra.mxu0 0.0
    %1462 = vmatprep.subr.mxu0 0.0
    %1463 = vmatpush1.msra.mxu0 0.0
    %1464 = vmatprep.subr.mxu0 0.0
    %1465 = vmatpush1.msra.mxu0 0.0
    %1466 = vmatprep.subr.mxu0 0.0
    %1467 = vmatpush1.msra.mxu0 0.0
    %1468 = vmatprep.subr.mxu0 0.0
    %1469 = vmatpush1.msra.mxu0 0.0
    %1470 = vmatprep.subr.mxu0 0.0
    %1471 = vmatpush1.msra.mxu0 0.0
    %1472 = vmatprep.subr.mxu0 0.0
    %1473 = vmatpush1.msra.mxu0 0.0
    %1474 = vmatprep.subr.mxu0 0.0
    %1475 = vmatpush1.msra.mxu0 0.0
    %1476 = vmatprep.subr.mxu0 0.0
    %1477 = vmatpush1.msra.mxu0 %v1126
    %1478 = vmatprep.subr.mxu0 0.0
    %1479 = vmatpush1.msra.mxu0 %v1125
    %1480 = vmatprep.subr.mxu0 0.0
    %1481 = vmatpush1.msra.mxu0 %v1124
    %1482 = vmatprep.subr.mxu0 0.0
    %1483 = vmatpush1.msra.mxu0 %v1123
    %1484 = vmatprep.subr.mxu0 0.0
    %1485 = vmatpush2.msra.mxu0 0.0
    %1486 = vmatprep.subr.mxu0 0.0
    %1487 = vmatpush2.msra.mxu0 0.0
    %1488 = vmatprep.subr.mxu0 0.0
    %1489 = vmatpush2.msra.mxu0 0.0
    %1490 = vmatprep.subr.mxu0 0.0
    %1491 = vmatpush2.msra.mxu0 0.0
    %1492 = vmatprep.subr.mxu0 0.0
    %1493 = vmatpush2.msra.mxu0 0.0
    %1494 = vmatprep.subr.mxu0 0.0
    %1495 = vmatpush2.msra.mxu0 0.0
    %1496 = vmatprep.subr.mxu0 0.0
    %1497 = vmatpush2.msra.mxu0 0.0
    %1498 = vmatprep.subr.mxu0 0.0
    %1499 = vmatpush2.msra.mxu0 0.0
    %1500 = vmatprep.subr.mxu0 0.0
    %1501 = vmatpush2.msra.mxu0 0.0
    %1502 = vmatprep.subr.mxu0 0.0
    %1503 = vmatpush2.msra.mxu0 0.0
    %1504 = vmatprep.subr.mxu0 0.0
    %1505 = vmatpush2.msra.mxu0 0.0
    %1506 = vmatprep.subr.mxu0 0.0
    %1507 = vmatpush2.msra.mxu0 0.0
    %1508 = vmatprep.subr.mxu0 0.0
    %1509 = vmatpush2.msra.mxu0 0.0
    %1510 = vmatprep.subr.mxu0 0.0
    %1511 = vmatpush2.msra.mxu0 0.0
    %1512 = vmatprep.subr.mxu0 0.0
    %1513 = vmatpush2.msra.mxu0 0.0
    %1514 = vmatprep.subr.mxu0 0.0
    %1515 = vmatpush2.msra.mxu0 0.0
    %1516 = vmatprep.mubr.f32.mxu0 0.0
    %1517 = vmatmul.mubr.f32.gmra.mxu0 %v1450
    %v1518 = vpop.f32.mrf.mxu0
    %v1519 = vadd.f32 0.0, %v1518
    %v1520 = vpop.f32.mrf.mxu0
    %1521 = vdwg.mxu0
    %v1522 = vadd.f32 %v1449, %v1519
    %v1523 = vxor.u32 %v1522, 2147483648
    %v1524 = vmul.f32 %v1523, 1.442695
    %v1525 = vpow.pop %v1524
    %v1526 = vadd.f32 %v1525, 1.0
    %v1527 = vrcp.pop %v1526
    %v1528 = vmul.f32 1.0, %v1527
    %v1529 = vtanh.pop %v1522
    %v1530 = vmul.f32 %v1528, %v1437
    %1532 = vrot.lane.b32.xlu0 %v1529, 64
    %v1533 = vpop.permute.xlu0 %1532
    %v1535 = vmul.f32 %v1528, %v1533
    %1537 = vrot.lane.b32.xlu0 %v1535, 32
    %v1538 = vpop.permute.xlu0 %1537
    %v1540 = vadd.f32 %v1530, %v1538
    %v1541 = vtanh.pop %v1540
    %1543 = vrot.lane.b32.xlu0 %v1541, 64
    %v1544 = vpop.permute.xlu0 %1543
    %v1546 = vmul.f32 %v1528, %v1544
    %1548 = vrot.lane.b32.xlu0 %v1546, 32
    %v1549 = vpop.permute.xlu0 %1548
    %1551 = vst.msk [vmem:[#allocation3 + $0x3] sm:$0x1] %vm308, %v1549
    %v1552 = vld [vmem:[#allocation2 + $0x4] sm:$0x1]
    %v1553 = vsel %vm197, %v1549, 0
    %1555 = vmatprep.subr.mxu0 0.0
    %1556 = vmatpush1.msra.mxu0 0.0
    %1557 = vmatprep.subr.mxu0 0.0
    %1558 = vmatpush1.msra.mxu0 0.0
    %1559 = vmatprep.subr.mxu0 0.0
    %1560 = vmatpush1.msra.mxu0 0.0
    %1561 = vmatprep.subr.mxu0 0.0
    %1562 = vmatpush1.msra.mxu0 0.0
    %1563 = vmatprep.subr.mxu0 0.0
    %1564 = vmatpush1.msra.mxu0 0.0
    %1565 = vmatprep.subr.mxu0 0.0
    %1566 = vmatpush1.msra.mxu0 0.0
    %1567 = vmatprep.subr.mxu0 0.0
    %1568 = vmatpush1.msra.mxu0 0.0
    %1569 = vmatprep.subr.mxu0 0.0
    %1570 = vmatpush1.msra.mxu0 0.0
    %1571 = vmatprep.subr.mxu0 0.0
    %1572 = vmatpush1.msra.mxu0 0.0
    %1573 = vmatprep.subr.mxu0 0.0
    %1574 = vmatpush1.msra.mxu0 0.0
    %1575 = vmatprep.subr.mxu0 0.0
    %1576 = vmatpush1.msra.mxu0 0.0
    %1577 = vmatprep.subr.mxu0 0.0
    %1578 = vmatpush1.msra.mxu0 0.0
    %1579 = vmatprep.subr.mxu0 0.0
    %1580 = vmatpush1.msra.mxu0 %v1126
    %1581 = vmatprep.subr.mxu0 0.0
    %1582 = vmatpush1.msra.mxu0 %v1125
    %1583 = vmatprep.subr.mxu0 0.0
    %1584 = vmatpush1.msra.mxu0 %v1124
    %1585 = vmatprep.subr.mxu0 0.0
    %1586 = vmatpush1.msra.mxu0 %v1123
    %1587 = vmatprep.subr.mxu0 0.0
    %1588 = vmatpush2.msra.mxu0 0.0
    %1589 = vmatprep.subr.mxu0 0.0
    %1590 = vmatpush2.msra.mxu0 0.0
    %1591 = vmatprep.subr.mxu0 0.0
    %1592 = vmatpush2.msra.mxu0 0.0
    %1593 = vmatprep.subr.mxu0 0.0
    %1594 = vmatpush2.msra.mxu0 0.0
    %1595 = vmatprep.subr.mxu0 0.0
    %1596 = vmatpush2.msra.mxu0 0.0
    %1597 = vmatprep.subr.mxu0 0.0
    %1598 = vmatpush2.msra.mxu0 0.0
    %1599 = vmatprep.subr.mxu0 0.0
    %1600 = vmatpush2.msra.mxu0 0.0
    %1601 = vmatprep.subr.mxu0 0.0
    %1602 = vmatpush2.msra.mxu0 0.0
    %1603 = vmatprep.subr.mxu0 0.0
    %1604 = vmatpush2.msra.mxu0 0.0
    %1605 = vmatprep.subr.mxu0 0.0
    %1606 = vmatpush2.msra.mxu0 0.0
    %1607 = vmatprep.subr.mxu0 0.0
    %1608 = vmatpush2.msra.mxu0 0.0
    %1609 = vmatprep.subr.mxu0 0.0
    %1610 = vmatpush2.msra.mxu0 0.0
    %1611 = vmatprep.subr.mxu0 0.0
    %1612 = vmatpush2.msra.mxu0 0.0
    %1613 = vmatprep.subr.mxu0 0.0
    %1614 = vmatpush2.msra.mxu0 0.0
    %1615 = vmatprep.subr.mxu0 0.0
    %1616 = vmatpush2.msra.mxu0 0.0
    %1617 = vmatprep.subr.mxu0 0.0
    %1618 = vmatpush2.msra.mxu0 0.0
    %1619 = vmatprep.mubr.f32.mxu0 0.0
    %1620 = vmatmul.mubr.f32.gmra.mxu0 %v1553
    %v1621 = vpop.f32.mrf.mxu0
    %v1622 = vadd.f32 0.0, %v1621
    %v1623 = vpop.f32.mrf.mxu0
    %1624 = vdwg.mxu0
    %v1625 = vadd.f32 %v1552, %v1622
    %v1626 = vxor.u32 %v1625, 2147483648
    %v1627 = vmul.f32 %v1626, 1.442695
    %v1628 = vpow.pop %v1627
    %v1629 = vadd.f32 %v1628, 1.0
    %v1630 = vrcp.pop %v1629
    %v1631 = vmul.f32 1.0, %v1630
    %v1632 = vtanh.pop %v1625
    %v1633 = vmul.f32 %v1631, %v1540
    %1635 = vrot.lane.b32.xlu0 %v1632, 64
    %v1636 = vpop.permute.xlu0 %1635
    %v1638 = vmul.f32 %v1631, %v1636
    %1640 = vrot.lane.b32.xlu0 %v1638, 32
    %v1641 = vpop.permute.xlu0 %1640
    %v1643 = vadd.f32 %v1633, %v1641
    %v1644 = vtanh.pop %v1643
    %1646 = vrot.lane.b32.xlu0 %v1644, 64
    %v1647 = vpop.permute.xlu0 %1646
    %v1649 = vmul.f32 %v1631, %v1647
    %1651 = vrot.lane.b32.xlu0 %v1649, 32
    %v1652 = vpop.permute.xlu0 %1651
    %1654 = vst.msk [vmem:[#allocation3 + $0x4] sm:$0x1] %vm308, %v1652
    %v1655 = vld [vmem:[#allocation2 + $0x5] sm:$0x1]
    %v1656 = vsel %vm197, %v1652, 0
    %1658 = vmatprep.subr.mxu0 0.0
    %1659 = vmatpush1.msra.mxu0 0.0
    %1660 = vmatprep.subr.mxu0 0.0
    %1661 = vmatpush1.msra.mxu0 0.0
    %1662 = vmatprep.subr.mxu0 0.0
    %1663 = vmatpush1.msra.mxu0 0.0
    %1664 = vmatprep.subr.mxu0 0.0
    %1665 = vmatpush1.msra.mxu0 0.0
    %1666 = vmatprep.subr.mxu0 0.0
    %1667 = vmatpush1.msra.mxu0 0.0
    %1668 = vmatprep.subr.mxu0 0.0
    %1669 = vmatpush1.msra.mxu0 0.0
    %1670 = vmatprep.subr.mxu0 0.0
    %1671 = vmatpush1.msra.mxu0 0.0
    %1672 = vmatprep.subr.mxu0 0.0
    %1673 = vmatpush1.msra.mxu0 0.0
    %1674 = vmatprep.subr.mxu0 0.0
    %1675 = vmatpush1.msra.mxu0 0.0
    %1676 = vmatprep.subr.mxu0 0.0
    %1677 = vmatpush1.msra.mxu0 0.0
    %1678 = vmatprep.subr.mxu0 0.0
    %1679 = vmatpush1.msra.mxu0 0.0
    %1680 = vmatprep.subr.mxu0 0.0
    %1681 = vmatpush1.msra.mxu0 0.0
    %1682 = vmatprep.subr.mxu0 0.0
    %1683 = vmatpush1.msra.mxu0 %v1126
    %1684 = vmatprep.subr.mxu0 0.0
    %1685 = vmatpush1.msra.mxu0 %v1125
    %1686 = vmatprep.subr.mxu0 0.0
    %1687 = vmatpush1.msra.mxu0 %v1124
    %1688 = vmatprep.subr.mxu0 0.0
    %1689 = vmatpush1.msra.mxu0 %v1123
    %1690 = vmatprep.subr.mxu0 0.0
    %1691 = vmatpush2.msra.mxu0 0.0
    %1692 = vmatprep.subr.mxu0 0.0
    %1693 = vmatpush2.msra.mxu0 0.0
    %1694 = vmatprep.subr.mxu0 0.0
    %1695 = vmatpush2.msra.mxu0 0.0
    %1696 = vmatprep.subr.mxu0 0.0
    %1697 = vmatpush2.msra.mxu0 0.0
    %1698 = vmatprep.subr.mxu0 0.0
    %1699 = vmatpush2.msra.mxu0 0.0
    %1700 = vmatprep.subr.mxu0 0.0
    %1701 = vmatpush2.msra.mxu0 0.0
    %1702 = vmatprep.subr.mxu0 0.0
    %1703 = vmatpush2.msra.mxu0 0.0
    %1704 = vmatprep.subr.mxu0 0.0
    %1705 = vmatpush2.msra.mxu0 0.0
    %1706 = vmatprep.subr.mxu0 0.0
    %1707 = vmatpush2.msra.mxu0 0.0
    %1708 = vmatprep.subr.mxu0 0.0
    %1709 = vmatpush2.msra.mxu0 0.0
    %1710 = vmatprep.subr.mxu0 0.0
    %1711 = vmatpush2.msra.mxu0 0.0
    %1712 = vmatprep.subr.mxu0 0.0
    %1713 = vmatpush2.msra.mxu0 0.0
    %1714 = vmatprep.subr.mxu0 0.0
    %1715 = vmatpush2.msra.mxu0 0.0
    %1716 = vmatprep.subr.mxu0 0.0
    %1717 = vmatpush2.msra.mxu0 0.0
    %1718 = vmatprep.subr.mxu0 0.0
    %1719 = vmatpush2.msra.mxu0 0.0
    %1720 = vmatprep.subr.mxu0 0.0
    %1721 = vmatpush2.msra.mxu0 0.0
    %1722 = vmatprep.mubr.f32.mxu0 0.0
    %1723 = vmatmul.mubr.f32.gmra.mxu0 %v1656
    %v1724 = vpop.f32.mrf.mxu0
    %v1725 = vadd.f32 0.0, %v1724
    %v1726 = vpop.f32.mrf.mxu0
    %1727 = vdwg.mxu0
    %v1728 = vadd.f32 %v1655, %v1725
    %v1729 = vxor.u32 %v1728, 2147483648
    %v1730 = vmul.f32 %v1729, 1.442695
    %v1731 = vpow.pop %v1730
    %v1732 = vadd.f32 %v1731, 1.0
    %v1733 = vrcp.pop %v1732
    %v1734 = vmul.f32 1.0, %v1733
    %v1735 = vtanh.pop %v1728
    %v1736 = vmul.f32 %v1734, %v1643
    %1738 = vrot.lane.b32.xlu0 %v1735, 64
    %v1739 = vpop.permute.xlu0 %1738
    %v1741 = vmul.f32 %v1734, %v1739
    %1743 = vrot.lane.b32.xlu0 %v1741, 32
    %v1744 = vpop.permute.xlu0 %1743
    %v1746 = vadd.f32 %v1736, %v1744
    %v1747 = vtanh.pop %v1746
    %1749 = vrot.lane.b32.xlu0 %v1747, 64
    %v1750 = vpop.permute.xlu0 %1749
    %v1752 = vmul.f32 %v1734, %v1750
    %1754 = vrot.lane.b32.xlu0 %v1752, 32
    %v1755 = vpop.permute.xlu0 %1754
    %1757 = vst.msk [vmem:[#allocation3 + $0x5] sm:$0x1] %vm308, %v1755
    %v1758 = vld [vmem:[#allocation2 + $0x6] sm:$0x1]
    %v1759 = vsel %vm197, %v1755, 0
    %1761 = vmatprep.subr.mxu0 0.0
    %1762 = vmatpush1.msra.mxu0 0.0
    %1763 = vmatprep.subr.mxu0 0.0
    %1764 = vmatpush1.msra.mxu0 0.0
    %1765 = vmatprep.subr.mxu0 0.0
    %1766 = vmatpush1.msra.mxu0 0.0
    %1767 = vmatprep.subr.mxu0 0.0
    %1768 = vmatpush1.msra.mxu0 0.0
    %1769 = vmatprep.subr.mxu0 0.0
    %1770 = vmatpush1.msra.mxu0 0.0
    %1771 = vmatprep.subr.mxu0 0.0
    %1772 = vmatpush1.msra.mxu0 0.0
    %1773 = vmatprep.subr.mxu0 0.0
    %1774 = vmatpush1.msra.mxu0 0.0
    %1775 = vmatprep.subr.mxu0 0.0
    %1776 = vmatpush1.msra.mxu0 0.0
    %1777 = vmatprep.subr.mxu0 0.0
    %1778 = vmatpush1.msra.mxu0 0.0
    %1779 = vmatprep.subr.mxu0 0.0
    %1780 = vmatpush1.msra.mxu0 0.0
    %1781 = vmatprep.subr.mxu0 0.0
    %1782 = vmatpush1.msra.mxu0 0.0
    %1783 = vmatprep.subr.mxu0 0.0
    %1784 = vmatpush1.msra.mxu0 0.0
    %1785 = vmatprep.subr.mxu0 0.0
    %1786 = vmatpush1.msra.mxu0 %v1126
    %1787 = vmatprep.subr.mxu0 0.0
    %1788 = vmatpush1.msra.mxu0 %v1125
    %1789 = vmatprep.subr.mxu0 0.0
    %1790 = vmatpush1.msra.mxu0 %v1124
    %1791 = vmatprep.subr.mxu0 0.0
    %1792 = vmatpush1.msra.mxu0 %v1123
    %1793 = vmatprep.subr.mxu0 0.0
    %1794 = vmatpush2.msra.mxu0 0.0
    %1795 = vmatprep.subr.mxu0 0.0
    %1796 = vmatpush2.msra.mxu0 0.0
    %1797 = vmatprep.subr.mxu0 0.0
    %1798 = vmatpush2.msra.mxu0 0.0
    %1799 = vmatprep.subr.mxu0 0.0
    %1800 = vmatpush2.msra.mxu0 0.0
    %1801 = vmatprep.subr.mxu0 0.0
    %1802 = vmatpush2.msra.mxu0 0.0
    %1803 = vmatprep.subr.mxu0 0.0
    %1804 = vmatpush2.msra.mxu0 0.0
    %1805 = vmatprep.subr.mxu0 0.0
    %1806 = vmatpush2.msra.mxu0 0.0
    %1807 = vmatprep.subr.mxu0 0.0
    %1808 = vmatpush2.msra.mxu0 0.0
    %1809 = vmatprep.subr.mxu0 0.0
    %1810 = vmatpush2.msra.mxu0 0.0
    %1811 = vmatprep.subr.mxu0 0.0
    %1812 = vmatpush2.msra.mxu0 0.0
    %1813 = vmatprep.subr.mxu0 0.0
    %1814 = vmatpush2.msra.mxu0 0.0
    %1815 = vmatprep.subr.mxu0 0.0
    %1816 = vmatpush2.msra.mxu0 0.0
    %1817 = vmatprep.subr.mxu0 0.0
    %1818 = vmatpush2.msra.mxu0 0.0
    %1819 = vmatprep.subr.mxu0 0.0
    %1820 = vmatpush2.msra.mxu0 0.0
    %1821 = vmatprep.subr.mxu0 0.0
    %1822 = vmatpush2.msra.mxu0 0.0
    %1823 = vmatprep.subr.mxu0 0.0
    %1824 = vmatpush2.msra.mxu0 0.0
    %1825 = vmatprep.mubr.f32.mxu0 0.0
    %1826 = vmatmul.mubr.f32.gmra.mxu0 %v1759
    %v1827 = vpop.f32.mrf.mxu0
    %v1828 = vadd.f32 0.0, %v1827
    %v1829 = vpop.f32.mrf.mxu0
    %1830 = vdwg.mxu0
    %v1831 = vadd.f32 %v1758, %v1828
    %v1832 = vxor.u32 %v1831, 2147483648
    %v1833 = vmul.f32 %v1832, 1.442695
    %v1834 = vpow.pop %v1833
    %v1835 = vadd.f32 %v1834, 1.0
    %v1836 = vrcp.pop %v1835
    %v1837 = vmul.f32 1.0, %v1836
    %v1838 = vtanh.pop %v1831
    %v1839 = vmul.f32 %v1837, %v1746
    %1841 = vrot.lane.b32.xlu0 %v1838, 64
    %v1842 = vpop.permute.xlu0 %1841
    %v1844 = vmul.f32 %v1837, %v1842
    %1846 = vrot.lane.b32.xlu0 %v1844, 32
    %v1847 = vpop.permute.xlu0 %1846
    %v1849 = vadd.f32 %v1839, %v1847
    %v1850 = vtanh.pop %v1849
    %1852 = vrot.lane.b32.xlu0 %v1850, 64
    %v1853 = vpop.permute.xlu0 %1852
    %v1855 = vmul.f32 %v1837, %v1853
    %1857 = vrot.lane.b32.xlu0 %v1855, 32
    %v1858 = vpop.permute.xlu0 %1857
    %1860 = vst.msk [vmem:[#allocation3 + $0x6] sm:$0x1] %vm308, %v1858
    %v1861 = vld [vmem:[#allocation2 + $0x7] sm:$0x1]
    %v1862 = vsel %vm197, %v1858, 0
    %1864 = vmatprep.subr.mxu0 0.0
    %1865 = vmatpush1.msra.mxu0 0.0
    %1866 = vmatprep.subr.mxu0 0.0
    %1867 = vmatpush1.msra.mxu0 0.0
    %1868 = vmatprep.subr.mxu0 0.0
    %1869 = vmatpush1.msra.mxu0 0.0
    %1870 = vmatprep.subr.mxu0 0.0
    %1871 = vmatpush1.msra.mxu0 0.0
    %1872 = vmatprep.subr.mxu0 0.0
    %1873 = vmatpush1.msra.mxu0 0.0
    %1874 = vmatprep.subr.mxu0 0.0
    %1875 = vmatpush1.msra.mxu0 0.0
    %1876 = vmatprep.subr.mxu0 0.0
    %1877 = vmatpush1.msra.mxu0 0.0
    %1878 = vmatprep.subr.mxu0 0.0
    %1879 = vmatpush1.msra.mxu0 0.0
    %1880 = vmatprep.subr.mxu0 0.0
    %1881 = vmatpush1.msra.mxu0 0.0
    %1882 = vmatprep.subr.mxu0 0.0
    %1883 = vmatpush1.msra.mxu0 0.0
    %1884 = vmatprep.subr.mxu0 0.0
    %1885 = vmatpush1.msra.mxu0 0.0
    %1886 = vmatprep.subr.mxu0 0.0
    %1887 = vmatpush1.msra.mxu0 0.0
    %1888 = vmatprep.subr.mxu0 0.0
    %1889 = vmatpush1.msra.mxu0 %v1126
    %1890 = vmatprep.subr.mxu0 0.0
    %1891 = vmatpush1.msra.mxu0 %v1125
    %1892 = vmatprep.subr.mxu0 0.0
    %1893 = vmatpush1.msra.mxu0 %v1124
    %1894 = vmatprep.subr.mxu0 0.0
    %1895 = vmatpush1.msra.mxu0 %v1123
    %1896 = vmatprep.subr.mxu0 0.0
    %1897 = vmatpush2.msra.mxu0 0.0
    %1898 = vmatprep.subr.mxu0 0.0
    %1899 = vmatpush2.msra.mxu0 0.0
    %1900 = vmatprep.subr.mxu0 0.0
    %1901 = vmatpush2.msra.mxu0 0.0
    %1902 = vmatprep.subr.mxu0 0.0
    %1903 = vmatpush2.msra.mxu0 0.0
    %1904 = vmatprep.subr.mxu0 0.0
    %1905 = vmatpush2.msra.mxu0 0.0
    %1906 = vmatprep.subr.mxu0 0.0
    %1907 = vmatpush2.msra.mxu0 0.0
    %1908 = vmatprep.subr.mxu0 0.0
    %1909 = vmatpush2.msra.mxu0 0.0
    %1910 = vmatprep.subr.mxu0 0.0
    %1911 = vmatpush2.msra.mxu0 0.0
    %1912 = vmatprep.subr.mxu0 0.0
    %1913 = vmatpush2.msra.mxu0 0.0
    %1914 = vmatprep.subr.mxu0 0.0
    %1915 = vmatpush2.msra.mxu0 0.0
    %1916 = vmatprep.subr.mxu0 0.0
    %1917 = vmatpush2.msra.mxu0 0.0
    %1918 = vmatprep.subr.mxu0 0.0
    %1919 = vmatpush2.msra.mxu0 0.0
    %1920 = vmatprep.subr.mxu0 0.0
    %1921 = vmatpush2.msra.mxu0 0.0
    %1922 = vmatprep.subr.mxu0 0.0
    %1923 = vmatpush2.msra.mxu0 0.0
    %1924 = vmatprep.subr.mxu0 0.0
    %1925 = vmatpush2.msra.mxu0 0.0
    %1926 = vmatprep.subr.mxu0 0.0
    %1927 = vmatpush2.msra.mxu0 0.0
    %1928 = vmatprep.mubr.f32.mxu0 0.0
    %1929 = vmatmul.mubr.f32.gmra.mxu0 %v1862
    %v1930 = vpop.f32.mrf.mxu0
    %v1931 = vadd.f32 0.0, %v1930
    %v1932 = vpop.f32.mrf.mxu0
    %1933 = vdwg.mxu0
    %v1934 = vadd.f32 %v1861, %v1931
    %v1935 = vxor.u32 %v1934, 2147483648
    %v1936 = vmul.f32 %v1935, 1.442695
    %v1937 = vpow.pop %v1936
    %v1938 = vadd.f32 %v1937, 1.0
    %v1939 = vrcp.pop %v1938
    %v1940 = vmul.f32 1.0, %v1939
    %v1941 = vtanh.pop %v1934
    %v1942 = vmul.f32 %v1940, %v1849
    %1944 = vrot.lane.b32.xlu0 %v1941, 64
    %v1945 = vpop.permute.xlu0 %1944
    %v1947 = vmul.f32 %v1940, %v1945
    %1949 = vrot.lane.b32.xlu0 %v1947, 32
    %v1950 = vpop.permute.xlu0 %1949
    %v1952 = vadd.f32 %v1942, %v1950
    %v1953 = vtanh.pop %v1952
    %1955 = vrot.lane.b32.xlu0 %v1953, 64
    %v1956 = vpop.permute.xlu0 %1955
    %v1958 = vmul.f32 %v1940, %v1956
    %1960 = vrot.lane.b32.xlu0 %v1958, 32
    %v1961 = vpop.permute.xlu0 %1960
    %1963 = vst.msk [vmem:[#allocation3 + $0x7] sm:$0x1] %vm308, %v1961
    %s1964 = scalar_lea.vmem [#allocation14], 1
    %1965 = vst.msk [vmem:[%s1964] sm:$0x1] %vm308, %v1961
    %1967 = vrot.lane.b32.xlu0 %v1952, 96
    %v1968 = vpop.permute.xlu0 %1967
    %s1970 = scalar_lea.vmem [#allocation16], 1
    %1971 = vst.msk [vmem:[%s1970] sm:$0x1] %vm308, %v1968
    %v1972 = vld [vmem:[#allocation3] sm:$0xff]
    %v1973 = vld [vmem:[%s7] sm:$0xff]
    %v1974 = vld [vmem:[%s7 + $0x8] sm:$0xff]
    %v1975 = vld [vmem:[%s7 + $0x10] sm:$0xff]
    %v1976 = vld [vmem:[%s7 + $0x18] sm:$0xff]
    %v1977 = vld [vmem:[#allocation12] sm:$0x1]
    %v1979 = vlaneseq
    %v1980 = vshrl.u32 %v1979, 7
    %v1981 = vsub.s32 0, %v1980
    %v1982 = vrot.slane %v1977, %v1981
    %v1985 = vsel %vm197, %v1972, 0
    %1987 = vmatprep.subr.mxu0 0.0
    %1988 = vmatpush1.msra.mxu0 0.0
    %1989 = vmatprep.subr.mxu0 0.0
    %1990 = vmatpush1.msra.mxu0 0.0
    %1991 = vmatprep.subr.mxu0 0.0
    %1992 = vmatpush1.msra.mxu0 0.0
    %1993 = vmatprep.subr.mxu0 0.0
    %1994 = vmatpush1.msra.mxu0 0.0
    %1995 = vmatprep.subr.mxu0 0.0
    %1996 = vmatpush1.msra.mxu0 0.0
    %1997 = vmatprep.subr.mxu0 0.0
    %1998 = vmatpush1.msra.mxu0 0.0
    %1999 = vmatprep.subr.mxu0 0.0
    %2000 = vmatpush1.msra.mxu0 0.0
    %2001 = vmatprep.subr.mxu0 0.0
    %2002 = vmatpush1.msra.mxu0 0.0
    %2003 = vmatprep.subr.mxu0 0.0
    %2004 = vmatpush1.msra.mxu0 0.0
    %2005 = vmatprep.subr.mxu0 0.0
    %2006 = vmatpush1.msra.mxu0 0.0
    %2007 = vmatprep.subr.mxu0 0.0
    %2008 = vmatpush1.msra.mxu0 0.0
    %2009 = vmatprep.subr.mxu0 0.0
    %2010 = vmatpush1.msra.mxu0 0.0
    %2011 = vmatprep.subr.mxu0 0.0
    %2012 = vmatpush1.msra.mxu0 %v1976
    %2013 = vmatprep.subr.mxu0 0.0
    %2014 = vmatpush1.msra.mxu0 %v1975
    %2015 = vmatprep.subr.mxu0 0.0
    %2016 = vmatpush1.msra.mxu0 %v1974
    %2017 = vmatprep.subr.mxu0 0.0
    %2018 = vmatpush1.msra.mxu0 %v1973
    %2019 = vmatprep.subr.mxu0 0.0
    %2020 = vmatpush2.msra.mxu0 0.0
    %2021 = vmatprep.subr.mxu0 0.0
    %2022 = vmatpush2.msra.mxu0 0.0
    %2023 = vmatprep.subr.mxu0 0.0
    %2024 = vmatpush2.msra.mxu0 0.0
    %2025 = vmatprep.subr.mxu0 0.0
    %2026 = vmatpush2.msra.mxu0 0.0
    %2027 = vmatprep.subr.mxu0 0.0
    %2028 = vmatpush2.msra.mxu0 0.0
    %2029 = vmatprep.subr.mxu0 0.0
    %2030 = vmatpush2.msra.mxu0 0.0
    %2031 = vmatprep.subr.mxu0 0.0
    %2032 = vmatpush2.msra.mxu0 0.0
    %2033 = vmatprep.subr.mxu0 0.0
    %2034 = vmatpush2.msra.mxu0 0.0
    %2035 = vmatprep.subr.mxu0 0.0
    %2036 = vmatpush2.msra.mxu0 0.0
    %2037 = vmatprep.subr.mxu0 0.0
    %2038 = vmatpush2.msra.mxu0 0.0
    %2039 = vmatprep.subr.mxu0 0.0
    %2040 = vmatpush2.msra.mxu0 0.0
    %2041 = vmatprep.subr.mxu0 0.0
    %2042 = vmatpush2.msra.mxu0 0.0
    %2043 = vmatprep.subr.mxu0 0.0
    %2044 = vmatpush2.msra.mxu0 0.0
    %2045 = vmatprep.subr.mxu0 0.0
    %2046 = vmatpush2.msra.mxu0 0.0
    %2047 = vmatprep.subr.mxu0 0.0
    %2048 = vmatpush2.msra.mxu0 0.0
    %2049 = vmatprep.subr.mxu0 0.0
    %2050 = vmatpush2.msra.mxu0 0.0
    %2051 = vmatprep.mubr.f32.mxu0 0.0
    %2052 = vmatmul.mubr.f32.gmra.mxu0 %v1985
    %v2053 = vpop.f32.mrf.mxu0
    %v2054 = vadd.f32 %v1982, %v2053
    %v2055 = vpop.f32.mrf.mxu0
    %2056 = vdwg.mxu0
    %v2057 = vxor.u32 %v2054, 2147483648
    %v2058 = vmul.f32 %v2057, 1.442695
    %v2059 = vpow.pop %v2058
    %v2060 = vadd.f32 %v2059, 1.0
    %v2061 = vrcp.pop %v2060
    %v2062 = vmul.f32 1.0, %v2061
    %vm2063 = vcmask 138240
    %2064 = vst.msk [vmem:[#allocation13] sm:$0xff] %vm2063, %v2062
    // Predicated region
    $region66: #{my_lstm_forward.1} parent=1 // pred_check
      _
    $region67: #{my_lstm_forward.1} parent=1 // pred_check_branch
      %2066 = sbr.rel (0) target = $region69
    $region68: #{my_lstm_forward.1} parent=1 // pred_region
      %s2068 = ssub.s32 128, 128
      %2069 = vsyncadd [#allocation6], %s2068
      %s2071 = sshll.u32 [#allocation13], 4
      %s2072 = int_to_ptr.vmem [resolvable:$true] %s2071
      %2074 = dma.vmem_to_hbm [thread:$0]  %s2072, 128, %s11, [#allocation6]
    $region69: #{my_lstm_forward.1} parent=1 // pred_fallthru
      _
    // Predicated region
    $region70: #{my_lstm_forward.1} parent=1 // pred_check
      _
    $region71: #{my_lstm_forward.1} parent=1 // pred_check_branch
      %2076 = sbr.rel (0) target = $region73
    $region72: #{my_lstm_forward.1} parent=1 // pred_region
      %s2078 = ssub.s32 32, 32
      %2079 = vsyncadd [#allocation15], %s2078
      %s2080 = sshll.u32 [#allocation14], 4
      %s2081 = int_to_ptr.vmem [resolvable:$true] %s2080
      %2086 = dma.vmem_to_hbm [thread:$0]  %s2081, 32, %s12, [#allocation15], 16, 16, 1
    $region73: #{my_lstm_forward.1} parent=1 // pred_fallthru
      _
    // Predicated region
    $region74: #{my_lstm_forward.1} parent=1 // pred_check
      _
    $region75: #{my_lstm_forward.1} parent=1 // pred_check_branch
      %2088 = sbr.rel (0) target = $region77
    $region76: #{my_lstm_forward.1} parent=1 // pred_region
      %s2090 = ssub.s32 32, 32
      %2091 = vsyncadd [#allocation15], %s2090
      %s2092 = sshll.u32 [#allocation16], 4
      %s2093 = int_to_ptr.vmem [resolvable:$true] %s2092
      %2098 = dma.vmem_to_hbm [thread:$0]  %s2093, 32, %s13, [#allocation15], 16, 16, 1
    $region77: #{my_lstm_forward.1} parent=1 // pred_fallthru
      _
    // Predicated region
    $region78: #{my_lstm_forward.1} parent=1 // pred_check
      _
    $region79: #{my_lstm_forward.1} parent=1 // pred_check_branch
      %2100 = sbr.rel (0) target = $region81
    $region80: #{my_lstm_forward.1} parent=1 // pred_region
      %2101 = dma.done [#allocation6], 128
    $region81: #{my_lstm_forward.1} parent=1 // pred_fallthru
      _
    // Predicated region
    $region82: #{my_lstm_forward.1} parent=1 // pred_check
      _
    $region83: #{my_lstm_forward.1} parent=1 // pred_check_branch
      %2103 = sbr.rel (0) target = $region85
    $region84: #{my_lstm_forward.1} parent=1 // pred_region
      %2104 = dma.done [#allocation15], 32
    $region85: #{my_lstm_forward.1} parent=1 // pred_fallthru
      _
    // Predicated region
    $region86: #{my_lstm_forward.1} parent=1 // pred_check
      _
    $region87: #{my_lstm_forward.1} parent=1 // pred_check_branch
      %2106 = sbr.rel (0) target = $region89
    $region88: #{my_lstm_forward.1} parent=1 // pred_region
      %2107 = dma.done [#allocation15], 32
    $region89: #{my_lstm_forward.1} parent=1 // pred_fallthru
      _
    %2108 = vsyncpa [#allocation5], 1
    %2109 = vsyncpa [#allocation8], 1
    %2110 = vsyncpa [#allocation11], 1
    %2111 = vsyncpa [#allocation6], 1
    %2112 = vsyncpa [#allocation15], 1

</llo_original>
